<compile_context>
chip_gen: v7x
topology: tpu7x:2x2x1
jax: 0.10.0
libtpu: 0.0.40
codegen_flags: <defaults>
</compile_context>

<pallas_src>
import functools

import jax
import jax.numpy as jnp
from jax import lax
from jax.experimental import pallas as pl
from jax.experimental.pallas import tpu as pltpu


def _round_up(x, m):
    return (x + m - 1) // m * m


def _chip_budget():
    """(frame_tile, vmem_limit_bytes) per TPU generation; conservative
    (v7x, 64 MiB VMEM) fallback if the hardware query is unavailable."""
    try:
        cap = pltpu.get_tpu_info().vmem_capacity_bytes
    except Exception:
        cap = 64 * 1024 * 1024
    if cap >= 100 * 1024 * 1024:          # v5e / v6e: 128 MiB VMEM per core
        return 512, 80 * 1024 * 1024
    return 256, 44 * 1024 * 1024          # v7x: 64 MiB VMEM per core


def _speech_encoder_kernel(frames_ref, dft_ref, gamma_ref, beta_ref,
                           w1_ref, b1_ref, w2_ref, b2_ref, out_ref,
                           *, n_freq, f_pad):
    # frames_ref: [1, tT, N] bf16 -- one (batch, frame-tile) slab.  The Hann
    # window is folded into dft_ref, so no per-step windowing multiply.
    f = frames_ref[0]                                            # [tT, N] bf16

    # --- STFT: single MXU matmul against the combined (re | im) bf16 basis ---
    spec = jnp.dot(f, dft_ref[...], preferred_element_type=jnp.float32)
    re = spec[:, :f_pad]                                         # [tT, F_pad]
    im = spec[:, f_pad:]                                         # [tT, F_pad]
    mag = jnp.sqrt(re * re + im * im)                            # pad lanes == 0

    # --- LayerNorm over the true F features (padded lanes contribute 0) ---
    inv_f = 1.0 / float(n_freq)
    mu = jnp.sum(mag, axis=-1, keepdims=True) * inv_f
    ex2 = jnp.sum(mag * mag, axis=-1, keepdims=True) * inv_f
    var = ex2 - mu * mu
    xn = (mag - mu) * lax.rsqrt(var + 1e-5)
    xn = xn * gamma_ref[...] + beta_ref[...]                     # pad lanes -> 0

    # --- Linear1 (bf16 operands, f32 accumulate) + ReLU; Dropout(p=0) = id ---
    h = jnp.dot(xn.astype(jnp.bfloat16), w1_ref[...],
                preferred_element_type=jnp.float32) + b1_ref[...]
    h = jnp.maximum(h, 0.0)                                      # [tT, H] f32

    # --- Linear2 (bf16 operands, f32 accumulate) ---
    y = jnp.dot(h.astype(jnp.bfloat16), w2_ref[...],
                preferred_element_type=jnp.float32) + b2_ref[...]
    out_ref[0] = y.astype(out_ref.dtype)                         # [tT, D]


def speech_encoder_forward(x, kparams, *, n_fft, hop, frame_tile=None,
                           single_buffer_weights=True):
    """x: [B, T_samples] f32 -> [B, T_frames, d] f32 (MLP output; LM pass-through)."""
    B, T_samples = x.shape
    N = n_fft
    F = N // 2 + 1
    F_pad, H = kparams["w1"].shape
    D = kparams["w2"].shape[1]
    T = (T_samples - N) // hop + 1

    default_tile, vmem_limit = _chip_budget()
    if frame_tile is None:
        frame_tile = default_tile

    # Host-side framing (glue): overlapping windows [B, T, N], emitted in bf16
    # so the gather-amplified HBM copy and the per-tile input DMA are halved.
    idx = hop * jnp.arange(T)[:, None] + jnp.arange(N)[None, :]   # [T, N]
    frames = x[:, idx].astype(jnp.bfloat16)                       # [B, T, N]

    # Frame-axis tiling (multiple of 16 -> bf16 sublane-aligned blocks).
    # Shrink the tile if the grid would be too small to feed 2 TCs on v7x.
    tT = _round_up(min(frame_tile, _round_up(T, 16)), 16)
    while tT > 16 and B * pl.cdiv(T, tT) < 4:
        tT = _round_up(tT // 2, 16)
    Tp = _round_up(T, tT)
    if Tp != T:
        # Zero frames are benign: mag=0 -> xn=0 -> finite output, sliced off.
        frames = jnp.pad(frames, ((0, 0), (0, Tp - T), (0, 0)))

    grid = (B, Tp // tT)

    # Grid-invariant operands: full-array block + constant index_map -> VMEM
    # resident across the whole grid; Buffered(1) drops the useless 2nd copy.
    pmode = pl.Buffered(1) if single_buffer_weights else None

    def const2d(shape):
        if pmode is None:
            return pl.BlockSpec(shape, lambda b, t: (0, 0))
        return pl.BlockSpec(shape, lambda b, t: (0, 0), pipeline_mode=pmode)

    weight_bytes = sum(int(v.size) * v.dtype.itemsize for v in kparams.values())
    cost = pl.CostEstimate(
        flops=int(2 * B * Tp * (N * 2 * F_pad + F_pad * H + H * D)),
        transcendentals=int(B * Tp * (F_pad + 1)),
        bytes_accessed=int(2 * B * Tp * N + weight_bytes + 4 * B * Tp * D),
    )

    kernel = functools.partial(_speech_encoder_kernel, n_freq=F, f_pad=F_pad)

    out = pl.pallas_call(
        kernel,
        out_shape=jax.ShapeDtypeStruct((B, Tp, D), jnp.float32),
        grid_spec=pltpu.PrefetchScalarGridSpec(
            num_scalar_prefetch=0,
            grid=grid,
            in_specs=[
                pl.BlockSpec((1, tT, N), lambda b, t: (b, t, 0)),  # frames tile (bf16)
                const2d((N, 2 * F_pad)),   # windowed DFT basis (re | im), bf16
                const2d((1, F_pad)),       # LayerNorm gamma (0 in pad lanes)
                const2d((1, F_pad)),       # LayerNorm beta  (0 in pad lanes)
                const2d((F_pad, H)),       # Linear1 weight, bf16 (0 pad rows)
                const2d((1, H)),           # Linear1 bias, f32
                const2d((H, D)),           # Linear2 weight, bf16
                const2d((1, D)),           # Linear2 bias, f32
            ],
            out_specs=pl.BlockSpec((1, tT, D), lambda b, t: (b, t, 0)),
        ),
        compiler_params=pltpu.CompilerParams(
            dimension_semantics=("parallel", "parallel"),
            vmem_limit_bytes=vmem_limit,
        ),
        cost_estimate=cost,
    )(frames, kparams["dft"], kparams["gamma"], kparams["beta"],
      kparams["w1"], kparams["b1"], kparams["w2"], kparams["b2"])

    if Tp != T:
        out = out[:, :T, :]
    # TODO(synk): LanguageModel(d, lm_num, nheads) source not provided; pass-through.
    return out


def make_params(key, *, n_fft, d, hidden_dim):
    """Deterministic synthetic parameters matching the PyTorch module (f32)."""
    N = n_fft
    F = N // 2 + 1
    H = hidden_dim
    D = d

    n = jnp.arange(N, dtype=jnp.float32)
    window = 0.5 - 0.5 * jnp.cos(2.0 * jnp.pi * n / N)        # periodic Hann

    k = jnp.arange(F, dtype=jnp.float32)
    ang = 2.0 * jnp.pi * n[:, None] * k[None, :] / N
    dft_re = jnp.cos(ang)
    dft_im = -jnp.sin(ang)

    k1, k2, k3, k4 = jax.random.split(key, 4)
    lim1 = 1.0 / jnp.sqrt(F)
    lim2 = 1.0 / jnp.sqrt(H)
    return dict(
        window=window,
        dft_re=dft_re, dft_im=dft_im,
        ln_gamma=jnp.ones((F,), jnp.float32),
        ln_beta=jnp.zeros((F,), jnp.float32),
        w1=jax.random.uniform(k1, (F, H), jnp.float32, -lim1, lim1),
        b1=jax.random.uniform(k2, (H,), jnp.float32, -lim1, lim1),
        w2=jax.random.uniform(k3, (H, D), jnp.float32, -lim2, lim2),
        b2=jax.random.uniform(k4, (D,), jnp.float32, -lim2, lim2),
    )


def prepare_params(params, *, n_fft):
    """Fold the window into the DFT basis, lane-pad F to a multiple of 128,
    concatenate re|im into one matmul operand, and cast the matmul operands
    (DFT basis and MLP weights) to bf16."""
    N = n_fft
    F = N // 2 + 1
    F_pad = _round_up(F, 128)
    pad = F_pad - F

    win = params["window"][:, None]                                # [N, 1]
    dre = jnp.pad(params["dft_re"] * win, ((0, 0), (0, pad)))      # [N, F_pad]
    dim_ = jnp.pad(params["dft_im"] * win, ((0, 0), (0, pad)))     # [N, F_pad]
    dft = jnp.concatenate([dre, dim_], axis=1)                     # [N, 2*F_pad]

    return dict(
        dft=dft.astype(jnp.bfloat16),
        gamma=jnp.pad(params["ln_gamma"], (0, pad)).reshape(1, F_pad),
        beta=jnp.pad(params["ln_beta"], (0, pad)).reshape(1, F_pad),
        w1=jnp.pad(params["w1"], ((0, pad), (0, 0))).astype(jnp.bfloat16),
        b1=params["b1"].reshape(1, -1).astype(jnp.float32),
        w2=params["w2"].astype(jnp.bfloat16),
        b2=params["b2"].reshape(1, -1).astype(jnp.float32),
    )


def reference_forward(x, params, *, n_fft, hop):
    """Pure-JAX reference mirroring the kernel's mixed precision: bf16 matmul
    operands (window folded into the DFT basis *before* the cast, exactly as
    prepare_params does) with f32 accumulation; f32 LayerNorm."""
    N = n_fft
    T = (x.shape[1] - N) // hop + 1
    idx = hop * jnp.arange(T)[:, None] + jnp.arange(N)[None, :]
    frames = x[:, idx].astype(jnp.bfloat16)                        # [B, T, N]
    win = params["window"][:, None]
    dre = (params["dft_re"] * win).astype(jnp.bfloat16)
    dim_ = (params["dft_im"] * win).astype(jnp.bfloat16)
    re = jnp.einsum("btn,nf->btf", frames, dre,
                    preferred_element_type=jnp.float32)
    im = jnp.einsum("btn,nf->btf", frames, dim_,
                    preferred_element_type=jnp.float32)
    mag = jnp.sqrt(re * re + im * im)                              # [B, T, F]
    mu = jnp.mean(mag, axis=-1, keepdims=True)
    var = jnp.mean((mag - mu) ** 2, axis=-1, keepdims=True)
    xn = (mag - mu) * lax.rsqrt(var + 1e-5)
    xn = xn * params["ln_gamma"] + params["ln_beta"]
    h = jnp.einsum("btf,fh->bth", xn.astype(jnp.bfloat16),
                   params["w1"].astype(jnp.bfloat16),
                   preferred_element_type=jnp.float32) + params["b1"]
    h = jnp.maximum(h, 0.0)
    y = jnp.einsum("bth,hd->btd", h.astype(jnp.bfloat16),
                   params["w2"].astype(jnp.bfloat16),
                   preferred_element_type=jnp.float32) + params["b2"]
    return y


if __name__ == "__main__":
    # Small shapes consistent with the module (scaled down from
    # n_fft=2048 / input_dim=1025 / d=512 / hidden=2048).
    B = 2
    N_FFT = 32          # -> F = 17 freq bins (analogue of input_dim=1025)
    HOP = 16
    T_SAMPLES = 528     # -> T_frames = 32
    D = 32              # model dim d
    HIDDEN = 64         # hidden_dim
    FRAME_TILE = 16     # small frame tile so the (B, T-tile) grid has 4 steps

    key = jax.random.PRNGKey(0)
    kx, kp = jax.random.split(key)
    x = jax.random.normal(kx, (B, T_SAMPLES), jnp.float32)
    params = make_params(kp, n_fft=N_FFT, d=D, hidden_dim=HIDDEN)
    kparams = prepare_params(params, n_fft=N_FFT)

    fwd = jax.jit(functools.partial(
        speech_encoder_forward, n_fft=N_FFT, hop=HOP, frame_tile=FRAME_TILE))
    try:
        out = jax.block_until_ready(fwd(x, kparams))
    except Exception:
        # TODO(synk): pl.Buffered(1) not supported on this JAX version ->
        # fall back to the default double-buffered weight pipeline.
        fwd = jax.jit(functools.partial(
            speech_encoder_forward, n_fft=N_FFT, hop=HOP,
            frame_tile=FRAME_TILE, single_buffer_weights=False))
        out = jax.block_until_ready(fwd(x, kparams))

    ref = reference_forward(x, params, n_fft=N_FFT, hop=HOP)
    T = (T_SAMPLES - N_FFT) // HOP + 1
    assert out.shape == (B, T, D), out.shape
    err = float(jnp.max(jnp.abs(out - ref)))
    # bf16 STFT + MLP matmul operands -> agreement with the bf16-mirrored
    # reference to ~1e-2 (accumulation-order / rounding differences only).
    assert jnp.allclose(out, ref, atol=2e-2, rtol=2e-2), err

    print("KERNEL_OK")
</pallas_src>

<mosaic_0001>
module attributes {stable_mosaic.version = 11 : i64} {
  func.func @_speech_encoder_kernel(%arg0: i32, %arg1: i32, %arg2: memref<1x16x32xbf16, #tpu.memory_space<vmem>>, %arg3: memref<32x256xbf16, #tpu.memory_space<vmem>>, %arg4: memref<1x128xf32, #tpu.memory_space<vmem>>, %arg5: memref<1x128xf32, #tpu.memory_space<vmem>>, %arg6: memref<128x64xbf16, #tpu.memory_space<vmem>>, %arg7: memref<1x64xf32, #tpu.memory_space<vmem>>, %arg8: memref<64x32xbf16, #tpu.memory_space<vmem>>, %arg9: memref<1x32xf32, #tpu.memory_space<vmem>>, %arg10: memref<1x16x32xf32, #tpu.memory_space<vmem>>) attributes {dimension_semantics = [#tpu.dimension_semantics<parallel>, #tpu.dimension_semantics<parallel>], iteration_bounds = array<i64: 2, 2>, scalar_prefetch = 0 : i64, scratch_operands = 0 : i64, tpu.core_type = #tpu.core_type<tc>, window_params = [{transform_indices = @transform_0, window_bounds = array<i64: 1, 16, 32>}, {pipeline_mode = #tpu.pipeline_mode<synchronous>, transform_indices = @transform_1, window_bounds = array<i64: 32, 256>}, {pipeline_mode = #tpu.pipeline_mode<synchronous>, transform_indices = @transform_2, window_bounds = array<i64: 1, 128>}, {pipeline_mode = #tpu.pipeline_mode<synchronous>, transform_indices = @transform_3, window_bounds = array<i64: 1, 128>}, {pipeline_mode = #tpu.pipeline_mode<synchronous>, transform_indices = @transform_4, window_bounds = array<i64: 128, 64>}, {pipeline_mode = #tpu.pipeline_mode<synchronous>, transform_indices = @transform_5, window_bounds = array<i64: 1, 64>}, {pipeline_mode = #tpu.pipeline_mode<synchronous>, transform_indices = @transform_6, window_bounds = array<i64: 64, 32>}, {pipeline_mode = #tpu.pipeline_mode<synchronous>, transform_indices = @transform_7, window_bounds = array<i64: 1, 32>}, {transform_indices = @transform_8, window_bounds = array<i64: 1, 16, 32>}]} {
    %c0 = arith.constant 0 : index
    %c0_0 = arith.constant 0 : index
    %c0_1 = arith.constant 0 : index
    %0 = vector.load %arg2[%c0, %c0_0, %c0_1] : memref<1x16x32xbf16, #tpu.memory_space<vmem>>, vector<1x16x32xbf16>
    %1 = vector.shape_cast %0 : vector<1x16x32xbf16> to vector<16x32xbf16>
    %c0_2 = arith.constant 0 : index
    %c0_3 = arith.constant 0 : index
    %2 = vector.load %arg3[%c0_2, %c0_3] : memref<32x256xbf16, #tpu.memory_space<vmem>>, vector<32x256xbf16>
    %cst = arith.constant dense<0.000000e+00> : vector<16x256xf32>
    %3 = tpu.matmul %1, %2, %cst {dimension_numbers = #tpu.dot_dimension_numbers<[1], [0], [0], [1], [0, 0, 1, 1], [], []>} : vector<16x32xbf16>, vector<32x256xbf16>, vector<16x256xf32> -> vector<16x256xf32>
    %4 = vector.extract_strided_slice %3 {offsets = [0, 0], sizes = [16, 128], strides = [1, 1]} : vector<16x256xf32> to vector<16x128xf32>
    %5 = vector.extract_strided_slice %3 {offsets = [0, 128], sizes = [16, 128], strides = [1, 1]} : vector<16x256xf32> to vector<16x128xf32>
    %6 = arith.mulf %4, %4 : vector<16x128xf32>
    %7 = arith.mulf %5, %5 : vector<16x128xf32>
    %8 = arith.addf %6, %7 : vector<16x128xf32>
    %9 = math.sqrt %8 : vector<16x128xf32>
    %cst_4 = arith.constant dense<0.000000e+00> : vector<16xf32>
    %10 = vector.multi_reduction <add>, %9, %cst_4 [1] : vector<16x128xf32> to vector<16xf32>
    %11 = vector.shape_cast %10 : vector<16xf32> to vector<16x1xf32>
    %cst_5 = arith.constant 0.0588235296 : f32
    %12 = vector.broadcast %cst_5 : f32 to vector<16x1xf32>
    %13 = arith.mulf %11, %12 : vector<16x1xf32>
    %14 = arith.mulf %9, %9 : vector<16x128xf32>
    %cst_6 = arith.constant dense<0.000000e+00> : vector<16xf32>
    %15 = vector.multi_reduction <add>, %14, %cst_6 [1] : vector<16x128xf32> to vector<16xf32>
    %16 = vector.shape_cast %15 : vector<16xf32> to vector<16x1xf32>
    %cst_7 = arith.constant 0.0588235296 : f32
    %17 = vector.broadcast %cst_7 : f32 to vector<16x1xf32>
    %18 = arith.mulf %16, %17 : vector<16x1xf32>
    %19 = arith.mulf %13, %13 : vector<16x1xf32>
    %20 = arith.subf %18, %19 : vector<16x1xf32>
    %21 = vector.broadcast %13 : vector<16x1xf32> to vector<16x128xf32>
    %22 = arith.subf %9, %21 : vector<16x128xf32>
    %cst_8 = arith.constant 9.99999974E-6 : f32
    %23 = vector.broadcast %cst_8 : f32 to vector<16x1xf32>
    %24 = arith.addf %20, %23 : vector<16x1xf32>
    %25 = math.rsqrt %24 : vector<16x1xf32>
    %26 = vector.broadcast %25 : vector<16x1xf32> to vector<16x128xf32>
    %27 = arith.mulf %22, %26 : vector<16x128xf32>
    %c0_9 = arith.constant 0 : index
    %c0_10 = arith.constant 0 : index
    %28 = vector.load %arg4[%c0_9, %c0_10] : memref<1x128xf32, #tpu.memory_space<vmem>>, vector<1x128xf32>
    %29 = vector.broadcast %28 : vector<1x128xf32> to vector<16x128xf32>
    %30 = arith.mulf %27, %29 : vector<16x128xf32>
    %c0_11 = arith.constant 0 : index
    %c0_12 = arith.constant 0 : index
    %31 = vector.load %arg5[%c0_11, %c0_12] : memref<1x128xf32, #tpu.memory_space<vmem>>, vector<1x128xf32>
    %32 = vector.broadcast %31 : vector<1x128xf32> to vector<16x128xf32>
    %33 = arith.addf %30, %32 : vector<16x128xf32>
    %34 = arith.truncf %33 : vector<16x128xf32> to vector<16x128xbf16>
    %c0_13 = arith.constant 0 : index
    %c0_14 = arith.constant 0 : index
    %35 = vector.load %arg6[%c0_13, %c0_14] : memref<128x64xbf16, #tpu.memory_space<vmem>>, vector<128x64xbf16>
    %cst_15 = arith.constant dense<0.000000e+00> : vector<16x64xf32>
    %36 = tpu.matmul %34, %35, %cst_15 {dimension_numbers = #tpu.dot_dimension_numbers<[1], [0], [0], [1], [0, 0, 1, 1], [], []>} : vector<16x128xbf16>, vector<128x64xbf16>, vector<16x64xf32> -> vector<16x64xf32>
    %c0_16 = arith.constant 0 : index
    %c0_17 = arith.constant 0 : index
    %37 = vector.load %arg7[%c0_16, %c0_17] : memref<1x64xf32, #tpu.memory_space<vmem>>, vector<1x64xf32>
    %38 = vector.broadcast %37 : vector<1x64xf32> to vector<16x64xf32>
    %39 = arith.addf %36, %38 : vector<16x64xf32>
    %cst_18 = arith.constant 0.000000e+00 : f32
    %40 = vector.broadcast %cst_18 : f32 to vector<16x64xf32>
    %41 = arith.maximumf %39, %40 : vector<16x64xf32>
    %42 = arith.truncf %41 : vector<16x64xf32> to vector<16x64xbf16>
    %c0_19 = arith.constant 0 : index
    %c0_20 = arith.constant 0 : index
    %43 = vector.load %arg8[%c0_19, %c0_20] : memref<64x32xbf16, #tpu.memory_space<vmem>>, vector<64x32xbf16>
    %cst_21 = arith.constant dense<0.000000e+00> : vector<16x32xf32>
    %44 = tpu.matmul %42, %43, %cst_21 {dimension_numbers = #tpu.dot_dimension_numbers<[1], [0], [0], [1], [0, 0, 1, 1], [], []>} : vector<16x64xbf16>, vector<64x32xbf16>, vector<16x32xf32> -> vector<16x32xf32>
    %c0_22 = arith.constant 0 : index
    %c0_23 = arith.constant 0 : index
    %45 = vector.load %arg9[%c0_22, %c0_23] : memref<1x32xf32, #tpu.memory_space<vmem>>, vector<1x32xf32>
    %46 = vector.broadcast %45 : vector<1x32xf32> to vector<16x32xf32>
    %47 = arith.addf %44, %46 : vector<16x32xf32>
    %c0_24 = arith.constant 0 : index
    %c0_25 = arith.constant 0 : index
    %c0_26 = arith.constant 0 : index
    %48 = vector.load %arg10[%c0_24, %c0_25, %c0_26] : memref<1x16x32xf32, #tpu.memory_space<vmem>>, vector<1x16x32xf32>
    %49 = vector.shape_cast %48 : vector<1x16x32xf32> to vector<16x32xf32>
    %50 = vector.shape_cast %47 : vector<16x32xf32> to vector<1x16x32xf32>
    tpu.vector_store %arg10[%c0_24, %c0_25, %c0_26], %50 {strides = array<i32>} : memref<1x16x32xf32, #tpu.memory_space<vmem>>, vector<1x16x32xf32>,
    return
  }
  func.func @transform_0(%arg0: i32, %arg1: i32) -> (i32, i32, i32) {
    %c0_i32 = arith.constant 0 : i32
    %c0_i32_0 = arith.constant 0 : i32
    return %arg0, %arg1, %c0_i32 : i32, i32, i32
  }
  func.func @transform_1(%arg0: i32, %arg1: i32) -> (i32, i32) {
    %c0_i32 = arith.constant 0 : i32
    %c0_i32_0 = arith.constant 0 : i32
    %c0_i32_1 = arith.constant 0 : i32
    return %c0_i32, %c0_i32_0 : i32, i32
  }
  func.func @transform_2(%arg0: i32, %arg1: i32) -> (i32, i32) {
    %c0_i32 = arith.constant 0 : i32
    %c0_i32_0 = arith.constant 0 : i32
    %c0_i32_1 = arith.constant 0 : i32
    return %c0_i32, %c0_i32_0 : i32, i32
  }
  func.func @transform_3(%arg0: i32, %arg1: i32) -> (i32, i32) {
    %c0_i32 = arith.constant 0 : i32
    %c0_i32_0 = arith.constant 0 : i32
    %c0_i32_1 = arith.constant 0 : i32
    return %c0_i32, %c0_i32_0 : i32, i32
  }
  func.func @transform_4(%arg0: i32, %arg1: i32) -> (i32, i32) {
    %c0_i32 = arith.constant 0 : i32
    %c0_i32_0 = arith.constant 0 : i32
    %c0_i32_1 = arith.constant 0 : i32
    return %c0_i32, %c0_i32_0 : i32, i32
  }
  func.func @transform_5(%arg0: i32, %arg1: i32) -> (i32, i32) {
    %c0_i32 = arith.constant 0 : i32
    %c0_i32_0 = arith.constant 0 : i32
    %c0_i32_1 = arith.constant 0 : i32
    return %c0_i32, %c0_i32_0 : i32, i32
  }
  func.func @transform_6(%arg0: i32, %arg1: i32) -> (i32, i32) {
    %c0_i32 = arith.constant 0 : i32
    %c0_i32_0 = arith.constant 0 : i32
    %c0_i32_1 = arith.constant 0 : i32
    return %c0_i32, %c0_i32_0 : i32, i32
  }
  func.func @transform_7(%arg0: i32, %arg1: i32) -> (i32, i32) {
    %c0_i32 = arith.constant 0 : i32
    %c0_i32_0 = arith.constant 0 : i32
    %c0_i32_1 = arith.constant 0 : i32
    return %c0_i32, %c0_i32_0 : i32, i32
  }
  func.func @transform_8(%arg0: i32, %arg1: i32) -> (i32, i32, i32) {
    %c0_i32 = arith.constant 0 : i32
    %c0_i32_0 = arith.constant 0 : i32
    return %arg0, %arg1, %c0_i32 : i32, i32, i32
  }
}

module attributes {stable_mosaic.version = 11 : i64} {
  func.func @_speech_encoder_kernel(%arg0: i32, %arg1: i32, %arg2: memref<1x16x32xbf16, #tpu.memory_space<vmem>>, %arg3: memref<32x256xbf16, #tpu.memory_space<vmem>>, %arg4: memref<1x128xf32, #tpu.memory_space<vmem>>, %arg5: memref<1x128xf32, #tpu.memory_space<vmem>>, %arg6: memref<128x64xbf16, #tpu.memory_space<vmem>>, %arg7: memref<1x64xf32, #tpu.memory_space<vmem>>, %arg8: memref<64x32xbf16, #tpu.memory_space<vmem>>, %arg9: memref<1x32xf32, #tpu.memory_space<vmem>>, %arg10: memref<1x16x32xf32, #tpu.memory_space<vmem>>) attributes {dimension_semantics = [#tpu.dimension_semantics<parallel>, #tpu.dimension_semantics<parallel>], iteration_bounds = array<i64: 2, 2>, scalar_prefetch = 0 : i64, scratch_operands = 0 : i64, tpu.core_type = #tpu.core_type<tc>, window_params = [{transform_indices = @transform_0, window_bounds = array<i64: 1, 16, 32>}, {pipeline_mode = #tpu.pipeline_mode<synchronous>, transform_indices = @transform_1, window_bounds = array<i64: 32, 256>}, {pipeline_mode = #tpu.pipeline_mode<synchronous>, transform_indices = @transform_2, window_bounds = array<i64: 1, 128>}, {pipeline_mode = #tpu.pipeline_mode<synchronous>, transform_indices = @transform_3, window_bounds = array<i64: 1, 128>}, {pipeline_mode = #tpu.pipeline_mode<synchronous>, transform_indices = @transform_4, window_bounds = array<i64: 128, 64>}, {pipeline_mode = #tpu.pipeline_mode<synchronous>, transform_indices = @transform_5, window_bounds = array<i64: 1, 64>}, {pipeline_mode = #tpu.pipeline_mode<synchronous>, transform_indices = @transform_6, window_bounds = array<i64: 64, 32>}, {pipeline_mode = #tpu.pipeline_mode<synchronous>, transform_indices = @transform_7, window_bounds = array<i64: 1, 32>}, {transform_indices = @transform_8, window_bounds = array<i64: 1, 16, 32>}]} {
    %c0 = arith.constant 0 : index
    %c0_0 = arith.constant 0 : index
    %c0_1 = arith.constant 0 : index
    %0 = vector.load %arg2[%c0, %c0_0, %c0_1] : memref<1x16x32xbf16, #tpu.memory_space<vmem>>, vector<1x16x32xbf16>
    %1 = vector.shape_cast %0 : vector<1x16x32xbf16> to vector<16x32xbf16>
    %c0_2 = arith.constant 0 : index
    %c0_3 = arith.constant 0 : index
    %2 = vector.load %arg3[%c0_2, %c0_3] : memref<32x256xbf16, #tpu.memory_space<vmem>>, vector<32x256xbf16>
    %cst = arith.constant dense<0.000000e+00> : vector<16x256xf32>
    %3 = tpu.matmul %1, %2, %cst {dimension_numbers = #tpu.dot_dimension_numbers<[1], [0], [0], [1], [0, 0, 1, 1], [], []>} : vector<16x32xbf16>, vector<32x256xbf16>, vector<16x256xf32> -> vector<16x256xf32>
    %4 = vector.extract_strided_slice %3 {offsets = [0, 0], sizes = [16, 128], strides = [1, 1]} : vector<16x256xf32> to vector<16x128xf32>
    %5 = vector.extract_strided_slice %3 {offsets = [0, 128], sizes = [16, 128], strides = [1, 1]} : vector<16x256xf32> to vector<16x128xf32>
    %6 = arith.mulf %4, %4 : vector<16x128xf32>
    %7 = arith.mulf %5, %5 : vector<16x128xf32>
    %8 = arith.addf %6, %7 : vector<16x128xf32>
    %9 = math.sqrt %8 : vector<16x128xf32>
    %cst_4 = arith.constant dense<0.000000e+00> : vector<16xf32>
    %10 = vector.multi_reduction <add>, %9, %cst_4 [1] : vector<16x128xf32> to vector<16xf32>
    %11 = vector.shape_cast %10 : vector<16xf32> to vector<16x1xf32>
    %cst_5 = arith.constant 0.0588235296 : f32
    %12 = vector.broadcast %cst_5 : f32 to vector<16x1xf32>
    %13 = arith.mulf %11, %12 : vector<16x1xf32>
    %14 = arith.mulf %9, %9 : vector<16x128xf32>
    %cst_6 = arith.constant dense<0.000000e+00> : vector<16xf32>
    %15 = vector.multi_reduction <add>, %14, %cst_6 [1] : vector<16x128xf32> to vector<16xf32>
    %16 = vector.shape_cast %15 : vector<16xf32> to vector<16x1xf32>
    %cst_7 = arith.constant 0.0588235296 : f32
    %17 = vector.broadcast %cst_7 : f32 to vector<16x1xf32>
    %18 = arith.mulf %16, %17 : vector<16x1xf32>
    %19 = arith.mulf %13, %13 : vector<16x1xf32>
    %20 = arith.subf %18, %19 : vector<16x1xf32>
    %21 = vector.broadcast %13 : vector<16x1xf32> to vector<16x128xf32>
    %22 = arith.subf %9, %21 : vector<16x128xf32>
    %cst_8 = arith.constant 9.99999974E-6 : f32
    %23 = vector.broadcast %cst_8 : f32 to vector<16x1xf32>
    %24 = arith.addf %20, %23 : vector<16x1xf32>
    %25 = math.rsqrt %24 : vector<16x1xf32>
    %26 = vector.broadcast %25 : vector<16x1xf32> to vector<16x128xf32>
    %27 = arith.mulf %22, %26 : vector<16x128xf32>
    %c0_9 = arith.constant 0 : index
    %c0_10 = arith.constant 0 : index
    %28 = vector.load %arg4[%c0_9, %c0_10] : memref<1x128xf32, #tpu.memory_space<vmem>>, vector<1x128xf32>
    %29 = vector.broadcast %28 : vector<1x128xf32> to vector<16x128xf32>
    %30 = arith.mulf %27, %29 : vector<16x128xf32>
    %c0_11 = arith.constant 0 : index
    %c0_12 = arith.constant 0 : index
    %31 = vector.load %arg5[%c0_11, %c0_12] : memref<1x128xf32, #tpu.memory_space<vmem>>, vector<1x128xf32>
    %32 = vector.broadcast %31 : vector<1x128xf32> to vector<16x128xf32>
    %33 = arith.addf %30, %32 : vector<16x128xf32>
    %34 = arith.truncf %33 : vector<16x128xf32> to vector<16x128xbf16>
    %c0_13 = arith.constant 0 : index
    %c0_14 = arith.constant 0 : index
    %35 = vector.load %arg6[%c0_13, %c0_14] : memref<128x64xbf16, #tpu.memory_space<vmem>>, vector<128x64xbf16>
    %cst_15 = arith.constant dense<0.000000e+00> : vector<16x64xf32>
    %36 = tpu.matmul %34, %35, %cst_15 {dimension_numbers = #tpu.dot_dimension_numbers<[1], [0], [0], [1], [0, 0, 1, 1], [], []>} : vector<16x128xbf16>, vector<128x64xbf16>, vector<16x64xf32> -> vector<16x64xf32>
    %c0_16 = arith.constant 0 : index
    %c0_17 = arith.constant 0 : index
    %37 = vector.load %arg7[%c0_16, %c0_17] : memref<1x64xf32, #tpu.memory_space<vmem>>, vector<1x64xf32>
    %38 = vector.broadcast %37 : vector<1x64xf32> to vector<16x64xf32>
    %39 = arith.addf %36, %38 : vector<16x64xf32>
    %cst_18 = arith.constant 0.000000e+00 : f32
    %40 = vector.broadcast %cst_18 : f32 to vector<16x64xf32>
    %41 = arith.maximumf %39, %40 : vector<16x64xf32>
    %42 = arith.truncf %41 : vector<16x64xf32> to vector<16x64xbf16>
    %c0_19 = arith.constant 0 : index
    %c0_20 = arith.constant 0 : index
    %43 = vector.load %arg8[%c0_19, %c0_20] : memref<64x32xbf16, #tpu.memory_space<vmem>>, vector<64x32xbf16>
    %cst_21 = arith.constant dense<0.000000e+00> : vector<16x32xf32>
    %44 = tpu.matmul %42, %43, %cst_21 {dimension_numbers = #tpu.dot_dimension_numbers<[1], [0], [0], [1], [0, 0, 1, 1], [], []>} : vector<16x64xbf16>, vector<64x32xbf16>, vector<16x32xf32> -> vector<16x32xf32>
    %c0_22 = arith.constant 0 : index
    %c0_23 = arith.constant 0 : index
    %45 = vector.load %arg9[%c0_22, %c0_23] : memref<1x32xf32, #tpu.memory_space<vmem>>, vector<1x32xf32>
    %46 = vector.broadcast %45 : vector<1x32xf32> to vector<16x32xf32>
    %47 = arith.addf %44, %46 : vector<16x32xf32>
    %c0_24 = arith.constant 0 : index
    %c0_25 = arith.constant 0 : index
    %c0_26 = arith.constant 0 : index
    %48 = vector.load %arg10[%c0_24, %c0_25, %c0_26] : memref<1x16x32xf32, #tpu.memory_space<vmem>>, vector<1x16x32xf32>
    %49 = vector.shape_cast %48 : vector<1x16x32xf32> to vector<16x32xf32>
    %50 = vector.shape_cast %47 : vector<16x32xf32> to vector<1x16x32xf32>
    tpu.vector_store %arg10[%c0_24, %c0_25, %c0_26], %50 {strides = array<i32>} : memref<1x16x32xf32, #tpu.memory_space<vmem>>, vector<1x16x32xf32>,
    return
  }
  func.func @transform_0(%arg0: i32, %arg1: i32) -> (i32, i32, i32) {
    %c0_i32 = arith.constant 0 : i32
    %c0_i32_0 = arith.constant 0 : i32
    return %arg0, %arg1, %c0_i32 : i32, i32, i32
  }
  func.func @transform_1(%arg0: i32, %arg1: i32) -> (i32, i32) {
    %c0_i32 = arith.constant 0 : i32
    %c0_i32_0 = arith.constant 0 : i32
    %c0_i32_1 = arith.constant 0 : i32
    return %c0_i32, %c0_i32_0 : i32, i32
  }
  func.func @transform_2(%arg0: i32, %arg1: i32) -> (i32, i32) {
    %c0_i32 = arith.constant 0 : i32
    %c0_i32_0 = arith.constant 0 : i32
    %c0_i32_1 = arith.constant 0 : i32
    return %c0_i32, %c0_i32_0 : i32, i32
  }
  func.func @transform_3(%arg0: i32, %arg1: i32) -> (i32, i32) {
    %c0_i32 = arith.constant 0 : i32
    %c0_i32_0 = arith.constant 0 : i32
    %c0_i32_1 = arith.constant 0 : i32
    return %c0_i32, %c0_i32_0 : i32, i32
  }
  func.func @transform_4(%arg0: i32, %arg1: i32) -> (i32, i32) {
    %c0_i32 = arith.constant 0 : i32
    %c0_i32_0 = arith.constant 0 : i32
    %c0_i32_1 = arith.constant 0 : i32
    return %c0_i32, %c0_i32_0 : i32, i32
  }
  func.func @transform_5(%arg0: i32, %arg1: i32) -> (i32, i32) {
    %c0_i32 = arith.constant 0 : i32
    %c0_i32_0 = arith.constant 0 : i32
    %c0_i32_1 = arith.constant 0 : i32
    return %c0_i32, %c0_i32_0 : i32, i32
  }
  func.func @transform_6(%arg0: i32, %arg1: i32) -> (i32, i32) {
    %c0_i32 = arith.constant 0 : i32
    %c0_i32_0 = arith.constant 0 : i32
    %c0_i32_1 = arith.constant 0 : i32
    return %c0_i32, %c0_i32_0 : i32, i32
  }
  func.func @transform_7(%arg0: i32, %arg1: i32) -> (i32, i32) {
    %c0_i32 = arith.constant 0 : i32
    %c0_i32_0 = arith.constant 0 : i32
    %c0_i32_1 = arith.constant 0 : i32
    return %c0_i32, %c0_i32_0 : i32, i32
  }
  func.func @transform_8(%arg0: i32, %arg1: i32) -> (i32, i32, i32) {
    %c0_i32 = arith.constant 0 : i32
    %c0_i32_0 = arith.constant 0 : i32
    return %arg0, %arg1, %c0_i32 : i32, i32, i32
  }
}

</mosaic_0001>

<llo_original>
// kernel: speech_encoder_forward.1
$region0: #{speech_encoder_forward.1}
  #allocation0 [shape = 'u32[]', space=smem, size = 0x4, offset = 0x4, fixed_abs, tag = 'smem constant byte address 0x4 - core index']
  #allocation1 [shape = 'u32[144,128]{1,0:T(1,128)}', space=vmem, size = 0x12000, scoped, tag = 'internal scratch']
  %s0 = inlined_call_operand.vmem [shape: bf16[2,32,32], index: 0, kind: input, shape index: {}]
  %s1 = inlined_call_operand.vmem [shape: bf16[32,256], index: 1, kind: input, shape index: {}]
  %s2 = inlined_call_operand.vmem [shape: f32[1,128], index: 2, kind: input, shape index: {}]
  %s3 = inlined_call_operand.vmem [shape: f32[1,128], index: 3, kind: input, shape index: {}]
  %s4 = inlined_call_operand.vmem [shape: bf16[128,64], index: 4, kind: input, shape index: {}]
  %s5 = inlined_call_operand.vmem [shape: f32[1,64], index: 5, kind: input, shape index: {}]
  %s6 = inlined_call_operand.vmem [shape: bf16[64,32], index: 6, kind: input, shape index: {}]
  %s7 = inlined_call_operand.vmem [shape: f32[1,32], index: 7, kind: input, shape index: {}]
  %s8 = inlined_call_operand.hbm [shape: f32[2,32,32], index: 8, kind: output, shape index: {}]
  %s9 = sld [smem:[#allocation0]]
  $region65: #{speech_encoder_forward.1} parent=0
    _
  %s11 = ssub.s32 1, %s9
  %s12 = scalar_select 0, %s11, %s9
  $region1: #{speech_encoder_forward.1} parent=0
    #allocation2 [shape = 'u8[16384]{0}', space=vmem, size = 0x4000, scoped, tag = 'output window, operand 0']
    #allocation3 [shape = 's32[2]{0}', space=sflag, size = 0x8, scoped, tag = 'scoped memory for speech_encoder_forward.1']
    %13 = vsyncpa [#allocation3], 0
    %s14 = scalar_lea.sflag [#allocation3], 1
    %15 = vsyncpa %s14, 0
    loop: start=0, step=1, limit=6
    $region2: #{speech_encoder_forward.1} parent=1 // loop_pre_header
      _
    $region3: #{speech_encoder_forward.1} parent=1 // loop_header
      %s17 = sphi 0, %s21
      %p18 = scmp.ge.s32.totalorder %s17, 6
      %s24 = sphi 0, %s36
      %s25 = sphi 0, %s32
      %s26 = sphi 0, %s24
      %s27 = sphi 0, %s25
      %s28 = sphi 0, %s26
      %s29 = sphi 0, %s27
      %s41 = sphi 0, %s43
      %s44 = sphi 0, %s41
      %s45 = sphi 0, %s44
      %s61 = sphi 0, %s45
      %s65 = sphi 0, %s65
      %s67 = sphi 0, %s65
      %s68 = sphi 0, %s67
      %s82 = sphi 0, %s68
      %s86 = sphi 0, %s86
      %s88 = sphi 0, %s86
      %s89 = sphi 0, %s88
      %s103 = sphi 0, %s89
      %s107 = sphi 0, %s107
      %s109 = sphi 0, %s107
      %s110 = sphi 0, %s109
      %s124 = sphi 0, %s110
      %s128 = sphi 0, %s128
      %s130 = sphi 0, %s128
      %s131 = sphi 0, %s130
      %s145 = sphi 0, %s131
      %s149 = sphi 0, %s149
      %s151 = sphi 0, %s149
      %s152 = sphi 0, %s151
      %s166 = sphi 0, %s152
      %s170 = sphi 0, %s170
      %s172 = sphi 0, %s170
      %s173 = sphi 0, %s172
      %s187 = sphi 0, %s173
      %s191 = sphi 0, %s191
      %s193 = sphi 0, %s191
      %s194 = sphi 0, %s193
      %s208 = sphi 0, %s194
      %s216 = sphi 0, %s218
      %s219 = sphi 0, %s216
      %s220 = sphi 0, %s219
      %s236 = sphi 0, %s220
    $region4: #{speech_encoder_forward.1} parent=1 // loop_header_branch
      %20 = sbr.rel (%p18) target = $region8
    $region5: #{speech_encoder_forward.1} parent=1 // loop_body
      %s22 = ssub.s32 %s17, 1
      %s23 = ssub.s32 %s17, 2
      %s30 = sadd.s32 1, %s25
      %p31 = scmp.ge.s32.totalorder %s30, 2
      %s32 = scalar_select %p31, 0, %s30
      %s33 = sadd.s32 1, %s24
      %s34 = scalar_select %p31, %s33, %s24
      %p35 = scmp.ge.s32.totalorder %s34, 2
      %s36 = scalar_select %p35, 0, %s34
      %s37 = ssub.s32 %s24, %s36
      %s38 = ssub.s32 %s25, %s32
      %s39 = sor.u32 %s37, %s38
      %p40 = scmp.eq.s32.totalorder %s39, 0
      %s42 = sadd.s32 %s41, 1
      %s43 = scalar_select %p40, %s41, %s42
      %p46 = pneg %p40
      %p47 = scmp.eq.s32.totalorder %s17, 3
      %p48 = por %p46, %p47
      %p49 = scmp.ne.s32.totalorder %s41, %s44
      %p50 = scmp.eq.s32.totalorder %s17, 0
      %p51 = por %p49, %p50
      %p52 = scmp.ne.s32.totalorder %s41, %s44
      %p53 = scmp.eq.s32.totalorder %s22, 3
      %p54 = por %p52, %p53
      %p55 = scmp.ne.s32.totalorder %s44, %s45
      %p56 = scmp.eq.s32.totalorder %s22, 0
      %p57 = por %p55, %p56
      %p58 = scmp.ne.s32.totalorder %s44, %s45
      %p59 = scmp.eq.s32.totalorder %s23, 3
      %p60 = por %p58, %p59
      %p62 = scmp.ne.s32.totalorder %s45, %s61
      %p63 = scmp.eq.s32.totalorder %s23, 0
      %p64 = por %p62, %p63
      %s66 = sadd.s32 %s65, 1
      %p69 = scmp.eq.s32.totalorder %s17, 3
      %p70 = scmp.ne.s32.totalorder %s65, %s67
      %p71 = scmp.eq.s32.totalorder %s17, 0
      %p72 = por %p70, %p71
      %p73 = scmp.ne.s32.totalorder %s65, %s67
      %p74 = scmp.eq.s32.totalorder %s22, 3
      %p75 = por %p73, %p74
      %p76 = scmp.ne.s32.totalorder %s67, %s68
      %p77 = scmp.eq.s32.totalorder %s22, 0
      %p78 = por %p76, %p77
      %p79 = scmp.ne.s32.totalorder %s67, %s68
      %p80 = scmp.eq.s32.totalorder %s23, 3
      %p81 = por %p79, %p80
      %p83 = scmp.ne.s32.totalorder %s68, %s82
      %p84 = scmp.eq.s32.totalorder %s23, 0
      %p85 = por %p83, %p84
      %s87 = sadd.s32 %s86, 1
      %p90 = scmp.eq.s32.totalorder %s17, 3
      %p91 = scmp.ne.s32.totalorder %s86, %s88
      %p92 = scmp.eq.s32.totalorder %s17, 0
      %p93 = por %p91, %p92
      %p94 = scmp.ne.s32.totalorder %s86, %s88
      %p95 = scmp.eq.s32.totalorder %s22, 3
      %p96 = por %p94, %p95
      %p97 = scmp.ne.s32.totalorder %s88, %s89
      %p98 = scmp.eq.s32.totalorder %s22, 0
      %p99 = por %p97, %p98
      %p100 = scmp.ne.s32.totalorder %s88, %s89
      %p101 = scmp.eq.s32.totalorder %s23, 3
      %p102 = por %p100, %p101
      %p104 = scmp.ne.s32.totalorder %s89, %s103
      %p105 = scmp.eq.s32.totalorder %s23, 0
      %p106 = por %p104, %p105
      %s108 = sadd.s32 %s107, 1
      %p111 = scmp.eq.s32.totalorder %s17, 3
      %p112 = scmp.ne.s32.totalorder %s107, %s109
      %p113 = scmp.eq.s32.totalorder %s17, 0
      %p114 = por %p112, %p113
      %p115 = scmp.ne.s32.totalorder %s107, %s109
      %p116 = scmp.eq.s32.totalorder %s22, 3
      %p117 = por %p115, %p116
      %p118 = scmp.ne.s32.totalorder %s109, %s110
      %p119 = scmp.eq.s32.totalorder %s22, 0
      %p120 = por %p118, %p119
      %p121 = scmp.ne.s32.totalorder %s109, %s110
      %p122 = scmp.eq.s32.totalorder %s23, 3
      %p123 = por %p121, %p122
      %p125 = scmp.ne.s32.totalorder %s110, %s124
      %p126 = scmp.eq.s32.totalorder %s23, 0
      %p127 = por %p125, %p126
      %s129 = sadd.s32 %s128, 1
      %p132 = scmp.eq.s32.totalorder %s17, 3
      %p133 = scmp.ne.s32.totalorder %s128, %s130
      %p134 = scmp.eq.s32.totalorder %s17, 0
      %p135 = por %p133, %p134
      %p136 = scmp.ne.s32.totalorder %s128, %s130
      %p137 = scmp.eq.s32.totalorder %s22, 3
      %p138 = por %p136, %p137
      %p139 = scmp.ne.s32.totalorder %s130, %s131
      %p140 = scmp.eq.s32.totalorder %s22, 0
      %p141 = por %p139, %p140
      %p142 = scmp.ne.s32.totalorder %s130, %s131
      %p143 = scmp.eq.s32.totalorder %s23, 3
      %p144 = por %p142, %p143
      %p146 = scmp.ne.s32.totalorder %s131, %s145
      %p147 = scmp.eq.s32.totalorder %s23, 0
      %p148 = por %p146, %p147
      %s150 = sadd.s32 %s149, 1
      %p153 = scmp.eq.s32.totalorder %s17, 3
      %p154 = scmp.ne.s32.totalorder %s149, %s151
      %p155 = scmp.eq.s32.totalorder %s17, 0
      %p156 = por %p154, %p155
      %p157 = scmp.ne.s32.totalorder %s149, %s151
      %p158 = scmp.eq.s32.totalorder %s22, 3
      %p159 = por %p157, %p158
      %p160 = scmp.ne.s32.totalorder %s151, %s152
      %p161 = scmp.eq.s32.totalorder %s22, 0
      %p162 = por %p160, %p161
      %p163 = scmp.ne.s32.totalorder %s151, %s152
      %p164 = scmp.eq.s32.totalorder %s23, 3
      %p165 = por %p163, %p164
      %p167 = scmp.ne.s32.totalorder %s152, %s166
      %p168 = scmp.eq.s32.totalorder %s23, 0
      %p169 = por %p167, %p168
      %s171 = sadd.s32 %s170, 1
      %p174 = scmp.eq.s32.totalorder %s17, 3
      %p175 = scmp.ne.s32.totalorder %s170, %s172
      %p176 = scmp.eq.s32.totalorder %s17, 0
      %p177 = por %p175, %p176
      %p178 = scmp.ne.s32.totalorder %s170, %s172
      %p179 = scmp.eq.s32.totalorder %s22, 3
      %p180 = por %p178, %p179
      %p181 = scmp.ne.s32.totalorder %s172, %s173
      %p182 = scmp.eq.s32.totalorder %s22, 0
      %p183 = por %p181, %p182
      %p184 = scmp.ne.s32.totalorder %s172, %s173
      %p185 = scmp.eq.s32.totalorder %s23, 3
      %p186 = por %p184, %p185
      %p188 = scmp.ne.s32.totalorder %s173, %s187
      %p189 = scmp.eq.s32.totalorder %s23, 0
      %p190 = por %p188, %p189
      %s192 = sadd.s32 %s191, 1
      %p195 = scmp.eq.s32.totalorder %s17, 3
      %p196 = scmp.ne.s32.totalorder %s191, %s193
      %p197 = scmp.eq.s32.totalorder %s17, 0
      %p198 = por %p196, %p197
      %p199 = scmp.ne.s32.totalorder %s191, %s193
      %p200 = scmp.eq.s32.totalorder %s22, 3
      %p201 = por %p199, %p200
      %p202 = scmp.ne.s32.totalorder %s193, %s194
      %p203 = scmp.eq.s32.totalorder %s22, 0
      %p204 = por %p202, %p203
      %p205 = scmp.ne.s32.totalorder %s193, %s194
      %p206 = scmp.eq.s32.totalorder %s23, 3
      %p207 = por %p205, %p206
      %p209 = scmp.ne.s32.totalorder %s194, %s208
      %p210 = scmp.eq.s32.totalorder %s23, 0
      %p211 = por %p209, %p210
      %s212 = ssub.s32 %s24, %s36
      %s213 = ssub.s32 %s25, %s32
      %s214 = sor.u32 %s212, %s213
      %p215 = scmp.eq.s32.totalorder %s214, 0
      %s217 = sadd.s32 %s216, 1
      %s218 = scalar_select %p215, %s216, %s217
      %p221 = pneg %p215
      %p222 = scmp.eq.s32.totalorder %s17, 3
      %p223 = por %p221, %p222
      %p224 = scmp.ne.s32.totalorder %s216, %s219
      %p225 = scmp.eq.s32.totalorder %s17, 0
      %p226 = por %p224, %p225
      %p227 = scmp.ne.s32.totalorder %s216, %s219
      %p228 = scmp.eq.s32.totalorder %s22, 3
      %p229 = por %p227, %p228
      %p230 = scmp.ne.s32.totalorder %s219, %s220
      %p231 = scmp.eq.s32.totalorder %s22, 0
      %p232 = por %p230, %p231
      %p233 = scmp.ne.s32.totalorder %s219, %s220
      %p234 = scmp.eq.s32.totalorder %s23, 3
      %p235 = por %p233, %p234
      %p237 = scmp.ne.s32.totalorder %s220, %s236
      %p238 = scmp.eq.s32.totalorder %s23, 0
      %p239 = por %p237, %p238
      %p240 = scmp.le.s32.totalorder 1, %s17
      %p241 = scmp.lt.s32.totalorder %s17, 5
      %p242 = pnand %p240, %p241
      %p243 = pneg %p242
      // Predicated region
      $region9: #{speech_encoder_forward.1} parent=5 // pred_check
        _
      $region10: #{speech_encoder_forward.1} parent=5 // pred_check_branch
        %245 = sbr.rel (%p242) target = $region12
      $region11: #{speech_encoder_forward.1} parent=5 // pred_region
        %s246 = ssub.s32 %s17, 1
        // Predicated region
        $region13: #{speech_encoder_forward.1} parent=11 // pred_check
          %p247 = pneg %p78
        $region14: #{speech_encoder_forward.1} parent=11 // pred_check_branch
          %249 = sbr.rel (%p247) target = $region16
        $region15: #{speech_encoder_forward.1} parent=11 // pred_region
          _
        $region16: #{speech_encoder_forward.1} parent=11 // pred_fallthru
          _
        // Predicated region
        $region17: #{speech_encoder_forward.1} parent=11 // pred_check
          %p250 = pneg %p99
        $region18: #{speech_encoder_forward.1} parent=11 // pred_check_branch
          %252 = sbr.rel (%p250) target = $region20
        $region19: #{speech_encoder_forward.1} parent=11 // pred_region
          _
        $region20: #{speech_encoder_forward.1} parent=11 // pred_fallthru
          _
        // Predicated region
        $region21: #{speech_encoder_forward.1} parent=11 // pred_check
          %p253 = pneg %p120
        $region22: #{speech_encoder_forward.1} parent=11 // pred_check_branch
          %255 = sbr.rel (%p253) target = $region24
        $region23: #{speech_encoder_forward.1} parent=11 // pred_region
          _
        $region24: #{speech_encoder_forward.1} parent=11 // pred_fallthru
          _
        // Predicated region
        $region25: #{speech_encoder_forward.1} parent=11 // pred_check
          %p256 = pneg %p141
        $region26: #{speech_encoder_forward.1} parent=11 // pred_check_branch
          %258 = sbr.rel (%p256) target = $region28
        $region27: #{speech_encoder_forward.1} parent=11 // pred_region
          _
        $region28: #{speech_encoder_forward.1} parent=11 // pred_fallthru
          _
        // Predicated region
        $region29: #{speech_encoder_forward.1} parent=11 // pred_check
          %p259 = pneg %p162
        $region30: #{speech_encoder_forward.1} parent=11 // pred_check_branch
          %261 = sbr.rel (%p259) target = $region32
        $region31: #{speech_encoder_forward.1} parent=11 // pred_region
          _
        $region32: #{speech_encoder_forward.1} parent=11 // pred_fallthru
          _
        // Predicated region
        $region33: #{speech_encoder_forward.1} parent=11 // pred_check
          %p262 = pneg %p183
        $region34: #{speech_encoder_forward.1} parent=11 // pred_check_branch
          %264 = sbr.rel (%p262) target = $region36
        $region35: #{speech_encoder_forward.1} parent=11 // pred_region
          _
        $region36: #{speech_encoder_forward.1} parent=11 // pred_fallthru
          _
        // Predicated region
        $region37: #{speech_encoder_forward.1} parent=11 // pred_check
          %p265 = pneg %p204
        $region38: #{speech_encoder_forward.1} parent=11 // pred_check_branch
          %267 = sbr.rel (%p265) target = $region40
        $region39: #{speech_encoder_forward.1} parent=11 // pred_region
          _
        $region40: #{speech_encoder_forward.1} parent=11 // pred_fallthru
          _
      $region12: #{speech_encoder_forward.1} parent=5 // pred_fallthru
        _
      %p268 = scmp.lt.s32.totalorder %s17, 4
      // Predicated region
      $region41: #{speech_encoder_forward.1} parent=5 // pred_check
        %p269 = pneg %p268
      $region42: #{speech_encoder_forward.1} parent=5 // pred_check_branch
        %271 = sbr.rel (%p269) target = $region44
      $region43: #{speech_encoder_forward.1} parent=5 // pred_region
        // Predicated region
        $region45: #{speech_encoder_forward.1} parent=43 // pred_check
          %p272 = pneg %p51
        $region46: #{speech_encoder_forward.1} parent=43 // pred_check_branch
          %274 = sbr.rel (%p272) target = $region48
        $region47: #{speech_encoder_forward.1} parent=43 // pred_region
          %s275 = smul.u32 2, %s25
          %p276 = scmp.lt.s32.totalorder %s24, 1
          %s277 = scalar_select %p276, %s24, 1
          %p278 = scmp.lt.s32.totalorder %s275, 3
          %s279 = scalar_select %p278, %s275, 3
          %s280 = smul.addr %s277, 4
          %s281 = sadd.s32 %s279, %s280
          %s282 = smul.addr %s281, 4
          %s283 = scalar_lea.vmem %s0, %s282
          %s284 = smul.u32 2, %s25
        $region48: #{speech_encoder_forward.1} parent=43 // pred_fallthru
          _
      $region44: #{speech_encoder_forward.1} parent=5 // pred_fallthru
        _
      %p285 = scmp.le.s32.totalorder 1, %s17
      %p286 = scmp.lt.s32.totalorder %s17, 5
      %p287 = pnand %p285, %p286
      %p288 = pneg %p287
      // Predicated region
      $region49: #{speech_encoder_forward.1} parent=5 // pred_check
        _
      $region50: #{speech_encoder_forward.1} parent=5 // pred_check_branch
        %290 = sbr.rel (%p287) target = $region52
      $region51: #{speech_encoder_forward.1} parent=5 // pred_region
        %s291 = ssub.s32 %s17, 1
        %s292 = smul.u32 2, %s27
        %p293 = scmp.lt.s32.totalorder %s26, 1
        %s294 = scalar_select %p293, %s26, 1
        %p295 = scmp.lt.s32.totalorder %s292, 3
        %s296 = scalar_select %p295, %s292, 3
        %s297 = smul.addr %s294, 4
        %s298 = sadd.s32 %s296, %s297
        %s299 = smul.addr %s298, 4
        %s300 = scalar_lea.vmem %s0, %s299
        %p301 = pneg %p57
        %p302 = pneg %p54
        %p303 = pneg %p78
        %p304 = pneg %p75
        %p305 = pneg %p99
        %p306 = pneg %p96
        %p307 = pneg %p120
        %p308 = pneg %p117
        %p309 = pneg %p141
        %p310 = pneg %p138
        %p311 = pneg %p162
        %p312 = pneg %p159
        %p313 = pneg %p183
        %p314 = pneg %p180
        %p315 = pneg %p204
        %p316 = pneg %p201
        %p317 = pneg %p232
        %p318 = pneg %p229
        %s319 = sand.u32 %s219, 1
        %s320 = scalar_lea.sflag [#allocation3], %s319
        %s321 = sand.u32 %s219, 1
        %s322 = smul.addr %s321, 16
        %s323 = scalar_lea.vmem [#allocation2], %s322
        %s324 = smul.u32 2, %s27
        %p325 = scmp.lt.s32.totalorder %s26, 1
        %s326 = scalar_select %p325, %s26, 1
        %p327 = scmp.lt.s32.totalorder %s324, 3
        %s328 = scalar_select %p327, %s324, 3
        %s329 = smul.addr %s326, 4
        %s330 = sadd.s32 %s328, %s329
        %s331 = smul.addr %s330, 4
        %s332 = scalar_lea.vmem %s0, %s331
        %s333 = smul.u32 2, %s27
        %s334 = smul.u32 2, %s27
        %v336 = vld [vmem:[%s332] sm:$0xf]
        %v337 = vld [vmem:[%s332 + $0x4] sm:$0xf]
        %v338 = vld [vmem:[%s1] sm:$0xff]
        %v339 = vld [vmem:[%s1 + $0x8] sm:$0xff]
        %v340 = vld [vmem:[%s1 + $0x10] sm:$0xff]
        %v341 = vld [vmem:[%s1 + $0x18] sm:$0xff]
        %v344 = vunpack.c.l.b16 %v336
        %v345 = vunpack.c.l.b16 %v337
        %v346 = vpack.c.b16 %v345, %v344
        %v351 = vunpack.c.l.b16 %v338
        %v352 = vunpack.c.h.b16 %v338
        %v353 = vunpack.c.l.b16 %v339
        %v354 = vunpack.c.h.b16 %v339
        %v355 = vunpack.c.l.b16 %v340
        %v356 = vunpack.c.h.b16 %v340
        %v357 = vunpack.c.l.b16 %v341
        %v358 = vunpack.c.h.b16 %v341
        %v359 = vpack.c.b16 %v353, %v351
        %v360 = vpack.c.b16 %v354, %v352
        %v361 = vpack.c.b16 %v357, %v355
        %v362 = vpack.c.b16 %v358, %v356
        %vm367 = vcmask 261120
        %v369 = vsel %vm367, %v346, 0
        %371 = vmatprep.subr.bf16.mxu0 %v360
        %372 = vmatpush1.bf16.msra.mxu0 %v359
        %373 = vmatprep.subr.bf16.mxu0 %v362
        %374 = vmatpush1.bf16.msra.mxu0 %v361
        %375 = vmatprep.subr.bf16.mxu0 0
        %376 = vmatpush1.bf16.msra.mxu0 0
        %377 = vmatprep.subr.bf16.mxu0 0
        %378 = vmatpush1.bf16.msra.mxu0 0
        %379 = vmatprep.subr.bf16.mxu0 0
        %380 = vmatpush1.bf16.msra.mxu0 0
        %381 = vmatprep.subr.bf16.mxu0 0
        %382 = vmatpush1.bf16.msra.mxu0 0
        %383 = vmatprep.subr.bf16.mxu0 0
        %384 = vmatpush1.bf16.msra.mxu0 0
        %385 = vmatprep.subr.bf16.mxu0 0
        %386 = vmatpush1.bf16.msra.mxu0 0
        %387 = vmatprep.subr.bf16.mxu0 0
        %388 = vmatpush1.bf16.msra.mxu0 0
        %389 = vmatprep.subr.bf16.mxu0 0
        %390 = vmatpush1.bf16.msra.mxu0 0
        %391 = vmatprep.subr.bf16.mxu0 0
        %392 = vmatpush1.bf16.msra.mxu0 0
        %393 = vmatprep.subr.bf16.mxu0 0
        %394 = vmatpush1.bf16.msra.mxu0 0
        %395 = vmatprep.subr.bf16.mxu0 0
        %396 = vmatpush1.bf16.msra.mxu0 0
        %397 = vmatprep.subr.bf16.mxu0 0
        %398 = vmatpush1.bf16.msra.mxu0 0
        %399 = vmatprep.subr.bf16.mxu0 0
        %400 = vmatpush1.bf16.msra.mxu0 0
        %401 = vmatprep.subr.bf16.mxu0 0
        %402 = vmatpush1.bf16.msra.mxu0 0
        %403 = vmatprep.mubr.bf16.mxu0 0
        %404 = vmatmul.mubr.bf16.gmra.mrb[0].mxu0 %v369
        %v405 = vpop.f32.mrb[0].mxu0
        %v406 = vadd.f32 0.0, %v405
        %v407 = vpop.f32.mrb[0].mxu0
        %v408 = vadd.f32 0.0, %v407
        %v409 = vpop.f32.mrb[0].mxu0
        %v410 = vadd.f32 0.0, %v409
        %v411 = vpop.f32.mrb[0].mxu0
        %v412 = vadd.f32 0.0, %v411
        %413 = vdwg.mxu0
        %v414 = vmul.f32 %v406, %v406
        %v415 = vmul.f32 %v410, %v410
        %v416 = vmul.f32 %v408, %v408
        %v417 = vmul.f32 %v412, %v412
        %v418 = vadd.f32 %v414, %v416
        %v419 = vadd.f32 %v415, %v417
        %v420 = vrsqrt.pop %v418
        %v421 = vmul.f32 %v418, %v420
        %vm422 = vcmp.eq.f32.partialorder %v418, inf
        %v423 = vsel %vm422, %v418, %v421
        %vm424 = vcmp.eq.f32.partialorder %v418, 0.0
        %v425 = vand.u32 %v418, 2147483648
        %v426 = vsel %vm424, %v425, %v423
        %v427 = vrsqrt.pop %v419
        %v428 = vmul.f32 %v419, %v427
        %vm429 = vcmp.eq.f32.partialorder %v419, inf
        %v430 = vsel %vm429, %v419, %v428
        %vm431 = vcmp.eq.f32.partialorder %v419, 0.0
        %v432 = vand.u32 %v419, 2147483648
        %v433 = vsel %vm431, %v432, %v430
        %434 = vadd.xlane.f32.xlu0 %v426
        %v435 = vpop.xlane.xlu0 %434
        %436 = vadd.xlane.f32.xlu0 %v433
        %v437 = vpop.xlane.xlu0 %436
        %v438 = vmul.f32 %v435, 0.05882353
        %v439 = vmul.f32 %v437, 0.05882353
        %v440 = vmul.f32 %v426, %v426
        %v441 = vmul.f32 %v433, %v433
        %442 = vadd.xlane.f32.xlu0 %v440
        %v443 = vpop.xlane.xlu0 %442
        %444 = vadd.xlane.f32.xlu0 %v441
        %v445 = vpop.xlane.xlu0 %444
        %v446 = vmul.f32 %v443, 0.05882353
        %v447 = vmul.f32 %v445, 0.05882353
        %v448 = vmul.f32 %v438, %v438
        %v449 = vmul.f32 %v439, %v439
        %v450 = vsub.f32 %v446, %v448
        %v451 = vsub.f32 %v447, %v449
        %v452 = vsub.f32 %v426, %v438
        %v453 = vsub.f32 %v433, %v439
        %v454 = vadd.f32 %v450, 1e-05
        %v455 = vadd.f32 %v451, 1e-05
        %v456 = vrsqrt.pop %v454
        %v457 = vrsqrt.pop %v455
        %v458 = vmul.f32 %v452, %v456
        %v459 = vmul.f32 %v453, %v457
        %v460 = vld [vmem:[%s2] sm:$0x1]
        %v462 = vlaneseq
        %v463 = vshrl.u32 %v462, 7
        %v464 = vsub.s32 0, %v463
        %v465 = vrot.slane %v460, %v464
        %v467 = vmul.f32 %v458, %v465
        %v468 = vmul.f32 %v459, %v465
        %v469 = vld [vmem:[%s3] sm:$0x1]
        %v471 = vlaneseq
        %v472 = vshrl.u32 %v471, 7
        %v473 = vsub.s32 0, %v472
        %v474 = vrot.slane %v469, %v473
        %v476 = vadd.f32 %v467, %v474
        %v477 = vadd.f32 %v468, %v474
        %v478 = vpack.c.bf16 %v477, %v476
        %v479 = vld [vmem:[%s4] sm:$0xf]
        %v480 = vld [vmem:[%s4 + $0x4] sm:$0xf]
        %v481 = vld [vmem:[%s4 + $0x8] sm:$0xf]
        %v482 = vld [vmem:[%s4 + $0xc] sm:$0xf]
        %v483 = vld [vmem:[%s4 + $0x10] sm:$0xf]
        %v484 = vld [vmem:[%s4 + $0x14] sm:$0xf]
        %v485 = vld [vmem:[%s4 + $0x18] sm:$0xf]
        %v486 = vld [vmem:[%s4 + $0x1c] sm:$0xf]
        %v487 = vld [vmem:[%s4 + $0x20] sm:$0xf]
        %v488 = vld [vmem:[%s4 + $0x24] sm:$0xf]
        %v489 = vld [vmem:[%s4 + $0x28] sm:$0xf]
        %v490 = vld [vmem:[%s4 + $0x2c] sm:$0xf]
        %v491 = vld [vmem:[%s4 + $0x30] sm:$0xf]
        %v492 = vld [vmem:[%s4 + $0x34] sm:$0xf]
        %v493 = vld [vmem:[%s4 + $0x38] sm:$0xf]
        %v494 = vld [vmem:[%s4 + $0x3c] sm:$0xf]
        %v495 = vld [vmem:[%s5] sm:$0x1]
        %v497 = vlaneseq
        %v498 = vshrl.u32 %v497, 7
        %v499 = vsub.s32 0, %v498
        %v500 = vrot.slane %v495, %v499
        %v518 = vunpack.c.l.b16 %v479
        %v519 = vunpack.c.l.b16 %v480
        %v520 = vunpack.c.l.b16 %v481
        %v521 = vunpack.c.l.b16 %v482
        %v522 = vunpack.c.l.b16 %v483
        %v523 = vunpack.c.l.b16 %v484
        %v524 = vunpack.c.l.b16 %v485
        %v525 = vunpack.c.l.b16 %v486
        %v526 = vunpack.c.l.b16 %v487
        %v527 = vunpack.c.l.b16 %v488
        %v528 = vunpack.c.l.b16 %v489
        %v529 = vunpack.c.l.b16 %v490
        %v530 = vunpack.c.l.b16 %v491
        %v531 = vunpack.c.l.b16 %v492
        %v532 = vunpack.c.l.b16 %v493
        %v533 = vunpack.c.l.b16 %v494
        %v534 = vpack.c.b16 %v519, %v518
        %v535 = vpack.c.b16 %v521, %v520
        %v536 = vpack.c.b16 %v523, %v522
        %v537 = vpack.c.b16 %v525, %v524
        %v538 = vpack.c.b16 %v527, %v526
        %v539 = vpack.c.b16 %v529, %v528
        %v540 = vpack.c.b16 %v531, %v530
        %v541 = vpack.c.b16 %v533, %v532
        %550 = vmatprep.subr.bf16.mxu0 0
        %551 = vmatpush1.bf16.msra.mxu0 %v534
        %552 = vmatprep.subr.bf16.mxu0 0
        %553 = vmatpush1.bf16.msra.mxu0 %v535
        %554 = vmatprep.subr.bf16.mxu0 0
        %555 = vmatpush1.bf16.msra.mxu0 %v536
        %556 = vmatprep.subr.bf16.mxu0 0
        %557 = vmatpush1.bf16.msra.mxu0 %v537
        %558 = vmatprep.subr.bf16.mxu0 0
        %559 = vmatpush1.bf16.msra.mxu0 %v538
        %560 = vmatprep.subr.bf16.mxu0 0
        %561 = vmatpush1.bf16.msra.mxu0 %v539
        %562 = vmatprep.subr.bf16.mxu0 0
        %563 = vmatpush1.bf16.msra.mxu0 %v540
        %564 = vmatprep.subr.bf16.mxu0 0
        %565 = vmatpush1.bf16.msra.mxu0 %v541
        %566 = vmatprep.subr.bf16.mxu0 0
        %567 = vmatpush1.bf16.msra.mxu0 0
        %568 = vmatprep.subr.bf16.mxu0 0
        %569 = vmatpush1.bf16.msra.mxu0 0
        %570 = vmatprep.subr.bf16.mxu0 0
        %571 = vmatpush1.bf16.msra.mxu0 0
        %572 = vmatprep.subr.bf16.mxu0 0
        %573 = vmatpush1.bf16.msra.mxu0 0
        %574 = vmatprep.subr.bf16.mxu0 0
        %575 = vmatpush1.bf16.msra.mxu0 0
        %576 = vmatprep.subr.bf16.mxu0 0
        %577 = vmatpush1.bf16.msra.mxu0 0
        %578 = vmatprep.subr.bf16.mxu0 0
        %579 = vmatpush1.bf16.msra.mxu0 0
        %580 = vmatprep.subr.bf16.mxu0 0
        %581 = vmatpush1.bf16.msra.mxu0 0
        %582 = vmatprep.mubr.bf16.mxu0 0
        %583 = vmatmul.mubr.bf16.gmra.mrb[0].mxu0 %v478
        %v584 = vpop.f32.mrb[0].mxu0
        %v585 = vadd.f32 %v500, %v584
        %v586 = vpop.f32.mrb[0].mxu0
        %v587 = vpop.f32.mrb[0].mxu0
        %v588 = vadd.f32 %v500, %v587
        %v589 = vpop.f32.mrb[0].mxu0
        %590 = vdwg.mxu0
        %v591 = vmax.f32 %v585, 0.0
        %v592 = vmax.f32 %v588, 0.0
        %v593 = vpack.c.bf16 %v592, %v591
        %v594 = vld [vmem:[%s6] sm:$0xf]
        %v595 = vld [vmem:[%s6 + $0x4] sm:$0xf]
        %v596 = vld [vmem:[%s6 + $0x8] sm:$0xf]
        %v597 = vld [vmem:[%s6 + $0xc] sm:$0xf]
        %v598 = vld [vmem:[%s6 + $0x10] sm:$0xf]
        %v599 = vld [vmem:[%s6 + $0x14] sm:$0xf]
        %v600 = vld [vmem:[%s6 + $0x18] sm:$0xf]
        %v601 = vld [vmem:[%s6 + $0x1c] sm:$0xf]
        %v602 = vld [vmem:[%s7] sm:$0x1]
        %v604 = vlaneseq
        %v605 = vshrl.u32 %v604, 7
        %v606 = vsub.s32 0, %v605
        %v607 = vrot.slane %v602, %v606
        %v617 = vunpack.c.l.b16 %v594
        %v618 = vunpack.c.l.b16 %v595
        %v619 = vunpack.c.l.b16 %v596
        %v620 = vunpack.c.l.b16 %v597
        %v621 = vunpack.c.l.b16 %v598
        %v622 = vunpack.c.l.b16 %v599
        %v623 = vunpack.c.l.b16 %v600
        %v624 = vunpack.c.l.b16 %v601
        %v625 = vpack.c.b16 %v618, %v617
        %v626 = vpack.c.b16 %v620, %v619
        %v627 = vpack.c.b16 %v622, %v621
        %v628 = vpack.c.b16 %v624, %v623
        %vm633 = vcmask 523264
        %v635 = vsel %vm633, %v593, 0
        %637 = vmatprep.subr.bf16.mxu0 0
        %638 = vmatpush1.bf16.msra.mxu0 %v625
        %639 = vmatprep.subr.bf16.mxu0 0
        %640 = vmatpush1.bf16.msra.mxu0 %v626
        %641 = vmatprep.subr.bf16.mxu0 0
        %642 = vmatpush1.bf16.msra.mxu0 %v627
        %643 = vmatprep.subr.bf16.mxu0 0
        %644 = vmatpush1.bf16.msra.mxu0 %v628
        %645 = vmatprep.subr.bf16.mxu0 0
        %646 = vmatpush1.bf16.msra.mxu0 0
        %647 = vmatprep.subr.bf16.mxu0 0
        %648 = vmatpush1.bf16.msra.mxu0 0
        %649 = vmatprep.subr.bf16.mxu0 0
        %650 = vmatpush1.bf16.msra.mxu0 0
        %651 = vmatprep.subr.bf16.mxu0 0
        %652 = vmatpush1.bf16.msra.mxu0 0
        %653 = vmatprep.subr.bf16.mxu0 0
        %654 = vmatpush1.bf16.msra.mxu0 0
        %655 = vmatprep.subr.bf16.mxu0 0
        %656 = vmatpush1.bf16.msra.mxu0 0
        %657 = vmatprep.subr.bf16.mxu0 0
        %658 = vmatpush1.bf16.msra.mxu0 0
        %659 = vmatprep.subr.bf16.mxu0 0
        %660 = vmatpush1.bf16.msra.mxu0 0
        %661 = vmatprep.subr.bf16.mxu0 0
        %662 = vmatpush1.bf16.msra.mxu0 0
        %663 = vmatprep.subr.bf16.mxu0 0
        %664 = vmatpush1.bf16.msra.mxu0 0
        %665 = vmatprep.subr.bf16.mxu0 0
        %666 = vmatpush1.bf16.msra.mxu0 0
        %667 = vmatprep.subr.bf16.mxu0 0
        %668 = vmatpush1.bf16.msra.mxu0 0
        %669 = vmatprep.mubr.bf16.mxu0 0
        %670 = vmatmul.mubr.bf16.gmra.mrb[0].mxu0 %v635
        %v671 = vpop.f32.mrb[0].mxu0
        %v672 = vadd.f32 %v607, %v671
        %v673 = vpop.f32.mrb[0].mxu0
        %v674 = vpop.f32.mrb[0].mxu0
        %v675 = vadd.f32 %v607, %v674
        %v676 = vpop.f32.mrb[0].mxu0
        %677 = vdwg.mxu0
        %678 = vst.msk [vmem:[%s323] sm:$0xff] %vm367, %v672
        %679 = vst.msk [vmem:[%s323 + $0x8] sm:$0xff] %vm367, %v675
        %s680 = sand.u32 %s219, 1
        %s681 = scalar_lea.sflag [#allocation3], %s680
        %s682 = sand.u32 %s219, 1
        %s683 = smul.addr %s682, 16
        %s684 = scalar_lea.vmem [#allocation2], %s683
        // Predicated region
        $region53: #{speech_encoder_forward.1} parent=51 // pred_check
          %p685 = pneg %p229
        $region54: #{speech_encoder_forward.1} parent=51 // pred_check_branch
          %687 = sbr.rel (%p685) target = $region56
        $region55: #{speech_encoder_forward.1} parent=51 // pred_region
          %s688 = smul.u32 2, %s27
          %s690 = ssub.s32 256, 256
          %691 = vsyncadd %s681, %s690
          %s692 = smul.addr %s26, 4
          %s693 = sadd.s32 %s688, %s692
          %s694 = smul.addr %s693, 128
          %s695 = scalar_lea.hbm %s8, %s694
          %s696 = sshll.u32 %s684, 4
          %s697 = int_to_ptr.vmem [resolvable:$true] %s696
          %702 = dma.vmem_to_hbm [thread:$0]  %s697, 256, %s695, %s681, 128, 128, 8
        $region56: #{speech_encoder_forward.1} parent=51 // pred_fallthru
          _
      $region52: #{speech_encoder_forward.1} parent=5 // pred_fallthru
        _
      %p703 = scmp.le.s32.totalorder 2, %s17
      // Predicated region
      $region57: #{speech_encoder_forward.1} parent=5 // pred_check
        %p704 = pneg %p703
      $region58: #{speech_encoder_forward.1} parent=5 // pred_check_branch
        %706 = sbr.rel (%p704) target = $region60
      $region59: #{speech_encoder_forward.1} parent=5 // pred_region
        %s707 = ssub.s32 %s17, 2
        // Predicated region
        $region61: #{speech_encoder_forward.1} parent=59 // pred_check
          %p708 = pneg %p235
        $region62: #{speech_encoder_forward.1} parent=59 // pred_check_branch
          %710 = sbr.rel (%p708) target = $region64
        $region63: #{speech_encoder_forward.1} parent=59 // pred_region
          %s711 = sand.u32 %s220, 1
          %s712 = scalar_lea.sflag [#allocation3], %s711
          %s713 = sand.u32 %s220, 1
          %s714 = smul.addr %s713, 16
          %s715 = scalar_lea.vmem [#allocation2], %s714
          %716 = dma.done %s712, 256
        $region64: #{speech_encoder_forward.1} parent=59 // pred_fallthru
          _
      $region60: #{speech_encoder_forward.1} parent=5 // pred_fallthru
        _
    $region6: #{speech_encoder_forward.1} parent=1 // loop_footer
      %s21 = sadd.s32 1, %s17
    $region7: #{speech_encoder_forward.1} parent=1 // loop_footer_branch
      %16 = sbr.rel target = $region3
    $region8: #{speech_encoder_forward.1} parent=1 // loop_exit
      _
    %717 = vsyncpa [#allocation3], 1
    %s718 = scalar_lea.sflag [#allocation3], 1
    %719 = vsyncpa %s718, 1

// kernel: speech_encoder_forward.1
$region0: #{speech_encoder_forward.1}
  #allocation0 [shape = 'u32[]', space=smem, size = 0x4, offset = 0x4, fixed_abs, tag = 'smem constant byte address 0x4 - core index']
  #allocation1 [shape = 'u32[144,128]{1,0:T(1,128)}', space=vmem, size = 0x12000, scoped, tag = 'internal scratch']
  %s0 = inlined_call_operand.vmem [shape: bf16[2,32,32], index: 0, kind: input, shape index: {}]
  %s1 = inlined_call_operand.vmem [shape: bf16[32,256], index: 1, kind: input, shape index: {}]
  %s2 = inlined_call_operand.vmem [shape: f32[1,128], index: 2, kind: input, shape index: {}]
  %s3 = inlined_call_operand.vmem [shape: f32[1,128], index: 3, kind: input, shape index: {}]
  %s4 = inlined_call_operand.vmem [shape: bf16[128,64], index: 4, kind: input, shape index: {}]
  %s5 = inlined_call_operand.vmem [shape: f32[1,64], index: 5, kind: input, shape index: {}]
  %s6 = inlined_call_operand.vmem [shape: bf16[64,32], index: 6, kind: input, shape index: {}]
  %s7 = inlined_call_operand.vmem [shape: f32[1,32], index: 7, kind: input, shape index: {}]
  %s8 = inlined_call_operand.hbm [shape: f32[2,32,32], index: 8, kind: output, shape index: {}]
  %s9 = sld [smem:[#allocation0]]
  $region65: #{speech_encoder_forward.1} parent=0
    _
  %s11 = ssub.s32 1, %s9
  %s12 = scalar_select 0, %s11, %s9
  $region1: #{speech_encoder_forward.1} parent=0
    #allocation2 [shape = 'u8[16384]{0}', space=vmem, size = 0x4000, scoped, tag = 'output window, operand 0']
    #allocation3 [shape = 's32[2]{0}', space=sflag, size = 0x8, scoped, tag = 'scoped memory for speech_encoder_forward.1']
    %13 = vsyncpa [#allocation3], 0
    %s14 = scalar_lea.sflag [#allocation3], 1
    %15 = vsyncpa %s14, 0
    loop: start=0, step=1, limit=6
    $region2: #{speech_encoder_forward.1} parent=1 // loop_pre_header
      _
    $region3: #{speech_encoder_forward.1} parent=1 // loop_header
      %s17 = sphi 0, %s21
      %p18 = scmp.ge.s32.totalorder %s17, 6
      %s24 = sphi 0, %s36
      %s25 = sphi 0, %s32
      %s26 = sphi 0, %s24
      %s27 = sphi 0, %s25
      %s28 = sphi 0, %s26
      %s29 = sphi 0, %s27
      %s41 = sphi 0, %s43
      %s44 = sphi 0, %s41
      %s45 = sphi 0, %s44
      %s61 = sphi 0, %s45
      %s65 = sphi 0, %s65
      %s67 = sphi 0, %s65
      %s68 = sphi 0, %s67
      %s82 = sphi 0, %s68
      %s86 = sphi 0, %s86
      %s88 = sphi 0, %s86
      %s89 = sphi 0, %s88
      %s103 = sphi 0, %s89
      %s107 = sphi 0, %s107
      %s109 = sphi 0, %s107
      %s110 = sphi 0, %s109
      %s124 = sphi 0, %s110
      %s128 = sphi 0, %s128
      %s130 = sphi 0, %s128
      %s131 = sphi 0, %s130
      %s145 = sphi 0, %s131
      %s149 = sphi 0, %s149
      %s151 = sphi 0, %s149
      %s152 = sphi 0, %s151
      %s166 = sphi 0, %s152
      %s170 = sphi 0, %s170
      %s172 = sphi 0, %s170
      %s173 = sphi 0, %s172
      %s187 = sphi 0, %s173
      %s191 = sphi 0, %s191
      %s193 = sphi 0, %s191
      %s194 = sphi 0, %s193
      %s208 = sphi 0, %s194
      %s216 = sphi 0, %s218
      %s219 = sphi 0, %s216
      %s220 = sphi 0, %s219
      %s236 = sphi 0, %s220
    $region4: #{speech_encoder_forward.1} parent=1 // loop_header_branch
      %20 = sbr.rel (%p18) target = $region8
    $region5: #{speech_encoder_forward.1} parent=1 // loop_body
      %s22 = ssub.s32 %s17, 1
      %s23 = ssub.s32 %s17, 2
      %s30 = sadd.s32 1, %s25
      %p31 = scmp.ge.s32.totalorder %s30, 2
      %s32 = scalar_select %p31, 0, %s30
      %s33 = sadd.s32 1, %s24
      %s34 = scalar_select %p31, %s33, %s24
      %p35 = scmp.ge.s32.totalorder %s34, 2
      %s36 = scalar_select %p35, 0, %s34
      %s37 = ssub.s32 %s24, %s36
      %s38 = ssub.s32 %s25, %s32
      %s39 = sor.u32 %s37, %s38
      %p40 = scmp.eq.s32.totalorder %s39, 0
      %s42 = sadd.s32 %s41, 1
      %s43 = scalar_select %p40, %s41, %s42
      %p46 = pneg %p40
      %p47 = scmp.eq.s32.totalorder %s17, 3
      %p48 = por %p46, %p47
      %p49 = scmp.ne.s32.totalorder %s41, %s44
      %p50 = scmp.eq.s32.totalorder %s17, 0
      %p51 = por %p49, %p50
      %p52 = scmp.ne.s32.totalorder %s41, %s44
      %p53 = scmp.eq.s32.totalorder %s22, 3
      %p54 = por %p52, %p53
      %p55 = scmp.ne.s32.totalorder %s44, %s45
      %p56 = scmp.eq.s32.totalorder %s22, 0
      %p57 = por %p55, %p56
      %p58 = scmp.ne.s32.totalorder %s44, %s45
      %p59 = scmp.eq.s32.totalorder %s23, 3
      %p60 = por %p58, %p59
      %p62 = scmp.ne.s32.totalorder %s45, %s61
      %p63 = scmp.eq.s32.totalorder %s23, 0
      %p64 = por %p62, %p63
      %s66 = sadd.s32 %s65, 1
      %p69 = scmp.eq.s32.totalorder %s17, 3
      %p70 = scmp.ne.s32.totalorder %s65, %s67
      %p71 = scmp.eq.s32.totalorder %s17, 0
      %p72 = por %p70, %p71
      %p73 = scmp.ne.s32.totalorder %s65, %s67
      %p74 = scmp.eq.s32.totalorder %s22, 3
      %p75 = por %p73, %p74
      %p76 = scmp.ne.s32.totalorder %s67, %s68
      %p77 = scmp.eq.s32.totalorder %s22, 0
      %p78 = por %p76, %p77
      %p79 = scmp.ne.s32.totalorder %s67, %s68
      %p80 = scmp.eq.s32.totalorder %s23, 3
      %p81 = por %p79, %p80
      %p83 = scmp.ne.s32.totalorder %s68, %s82
      %p84 = scmp.eq.s32.totalorder %s23, 0
      %p85 = por %p83, %p84
      %s87 = sadd.s32 %s86, 1
      %p90 = scmp.eq.s32.totalorder %s17, 3
      %p91 = scmp.ne.s32.totalorder %s86, %s88
      %p92 = scmp.eq.s32.totalorder %s17, 0
      %p93 = por %p91, %p92
      %p94 = scmp.ne.s32.totalorder %s86, %s88
      %p95 = scmp.eq.s32.totalorder %s22, 3
      %p96 = por %p94, %p95
      %p97 = scmp.ne.s32.totalorder %s88, %s89
      %p98 = scmp.eq.s32.totalorder %s22, 0
      %p99 = por %p97, %p98
      %p100 = scmp.ne.s32.totalorder %s88, %s89
      %p101 = scmp.eq.s32.totalorder %s23, 3
      %p102 = por %p100, %p101
      %p104 = scmp.ne.s32.totalorder %s89, %s103
      %p105 = scmp.eq.s32.totalorder %s23, 0
      %p106 = por %p104, %p105
      %s108 = sadd.s32 %s107, 1
      %p111 = scmp.eq.s32.totalorder %s17, 3
      %p112 = scmp.ne.s32.totalorder %s107, %s109
      %p113 = scmp.eq.s32.totalorder %s17, 0
      %p114 = por %p112, %p113
      %p115 = scmp.ne.s32.totalorder %s107, %s109
      %p116 = scmp.eq.s32.totalorder %s22, 3
      %p117 = por %p115, %p116
      %p118 = scmp.ne.s32.totalorder %s109, %s110
      %p119 = scmp.eq.s32.totalorder %s22, 0
      %p120 = por %p118, %p119
      %p121 = scmp.ne.s32.totalorder %s109, %s110
      %p122 = scmp.eq.s32.totalorder %s23, 3
      %p123 = por %p121, %p122
      %p125 = scmp.ne.s32.totalorder %s110, %s124
      %p126 = scmp.eq.s32.totalorder %s23, 0
      %p127 = por %p125, %p126
      %s129 = sadd.s32 %s128, 1
      %p132 = scmp.eq.s32.totalorder %s17, 3
      %p133 = scmp.ne.s32.totalorder %s128, %s130
      %p134 = scmp.eq.s32.totalorder %s17, 0
      %p135 = por %p133, %p134
      %p136 = scmp.ne.s32.totalorder %s128, %s130
      %p137 = scmp.eq.s32.totalorder %s22, 3
      %p138 = por %p136, %p137
      %p139 = scmp.ne.s32.totalorder %s130, %s131
      %p140 = scmp.eq.s32.totalorder %s22, 0
      %p141 = por %p139, %p140
      %p142 = scmp.ne.s32.totalorder %s130, %s131
      %p143 = scmp.eq.s32.totalorder %s23, 3
      %p144 = por %p142, %p143
      %p146 = scmp.ne.s32.totalorder %s131, %s145
      %p147 = scmp.eq.s32.totalorder %s23, 0
      %p148 = por %p146, %p147
      %s150 = sadd.s32 %s149, 1
      %p153 = scmp.eq.s32.totalorder %s17, 3
      %p154 = scmp.ne.s32.totalorder %s149, %s151
      %p155 = scmp.eq.s32.totalorder %s17, 0
      %p156 = por %p154, %p155
      %p157 = scmp.ne.s32.totalorder %s149, %s151
      %p158 = scmp.eq.s32.totalorder %s22, 3
      %p159 = por %p157, %p158
      %p160 = scmp.ne.s32.totalorder %s151, %s152
      %p161 = scmp.eq.s32.totalorder %s22, 0
      %p162 = por %p160, %p161
      %p163 = scmp.ne.s32.totalorder %s151, %s152
      %p164 = scmp.eq.s32.totalorder %s23, 3
      %p165 = por %p163, %p164
      %p167 = scmp.ne.s32.totalorder %s152, %s166
      %p168 = scmp.eq.s32.totalorder %s23, 0
      %p169 = por %p167, %p168
      %s171 = sadd.s32 %s170, 1
      %p174 = scmp.eq.s32.totalorder %s17, 3
      %p175 = scmp.ne.s32.totalorder %s170, %s172
      %p176 = scmp.eq.s32.totalorder %s17, 0
      %p177 = por %p175, %p176
      %p178 = scmp.ne.s32.totalorder %s170, %s172
      %p179 = scmp.eq.s32.totalorder %s22, 3
      %p180 = por %p178, %p179
      %p181 = scmp.ne.s32.totalorder %s172, %s173
      %p182 = scmp.eq.s32.totalorder %s22, 0
      %p183 = por %p181, %p182
      %p184 = scmp.ne.s32.totalorder %s172, %s173
      %p185 = scmp.eq.s32.totalorder %s23, 3
      %p186 = por %p184, %p185
      %p188 = scmp.ne.s32.totalorder %s173, %s187
      %p189 = scmp.eq.s32.totalorder %s23, 0
      %p190 = por %p188, %p189
      %s192 = sadd.s32 %s191, 1
      %p195 = scmp.eq.s32.totalorder %s17, 3
      %p196 = scmp.ne.s32.totalorder %s191, %s193
      %p197 = scmp.eq.s32.totalorder %s17, 0
      %p198 = por %p196, %p197
      %p199 = scmp.ne.s32.totalorder %s191, %s193
      %p200 = scmp.eq.s32.totalorder %s22, 3
      %p201 = por %p199, %p200
      %p202 = scmp.ne.s32.totalorder %s193, %s194
      %p203 = scmp.eq.s32.totalorder %s22, 0
      %p204 = por %p202, %p203
      %p205 = scmp.ne.s32.totalorder %s193, %s194
      %p206 = scmp.eq.s32.totalorder %s23, 3
      %p207 = por %p205, %p206
      %p209 = scmp.ne.s32.totalorder %s194, %s208
      %p210 = scmp.eq.s32.totalorder %s23, 0
      %p211 = por %p209, %p210
      %s212 = ssub.s32 %s24, %s36
      %s213 = ssub.s32 %s25, %s32
      %s214 = sor.u32 %s212, %s213
      %p215 = scmp.eq.s32.totalorder %s214, 0
      %s217 = sadd.s32 %s216, 1
      %s218 = scalar_select %p215, %s216, %s217
      %p221 = pneg %p215
      %p222 = scmp.eq.s32.totalorder %s17, 3
      %p223 = por %p221, %p222
      %p224 = scmp.ne.s32.totalorder %s216, %s219
      %p225 = scmp.eq.s32.totalorder %s17, 0
      %p226 = por %p224, %p225
      %p227 = scmp.ne.s32.totalorder %s216, %s219
      %p228 = scmp.eq.s32.totalorder %s22, 3
      %p229 = por %p227, %p228
      %p230 = scmp.ne.s32.totalorder %s219, %s220
      %p231 = scmp.eq.s32.totalorder %s22, 0
      %p232 = por %p230, %p231
      %p233 = scmp.ne.s32.totalorder %s219, %s220
      %p234 = scmp.eq.s32.totalorder %s23, 3
      %p235 = por %p233, %p234
      %p237 = scmp.ne.s32.totalorder %s220, %s236
      %p238 = scmp.eq.s32.totalorder %s23, 0
      %p239 = por %p237, %p238
      %p240 = scmp.le.s32.totalorder 1, %s17
      %p241 = scmp.lt.s32.totalorder %s17, 5
      %p242 = pnand %p240, %p241
      %p243 = pneg %p242
      // Predicated region
      $region9: #{speech_encoder_forward.1} parent=5 // pred_check
        _
      $region10: #{speech_encoder_forward.1} parent=5 // pred_check_branch
        %245 = sbr.rel (%p242) target = $region12
      $region11: #{speech_encoder_forward.1} parent=5 // pred_region
        %s246 = ssub.s32 %s17, 1
        // Predicated region
        $region13: #{speech_encoder_forward.1} parent=11 // pred_check
          %p247 = pneg %p78
        $region14: #{speech_encoder_forward.1} parent=11 // pred_check_branch
          %249 = sbr.rel (%p247) target = $region16
        $region15: #{speech_encoder_forward.1} parent=11 // pred_region
          _
        $region16: #{speech_encoder_forward.1} parent=11 // pred_fallthru
          _
        // Predicated region
        $region17: #{speech_encoder_forward.1} parent=11 // pred_check
          %p250 = pneg %p99
        $region18: #{speech_encoder_forward.1} parent=11 // pred_check_branch
          %252 = sbr.rel (%p250) target = $region20
        $region19: #{speech_encoder_forward.1} parent=11 // pred_region
          _
        $region20: #{speech_encoder_forward.1} parent=11 // pred_fallthru
          _
        // Predicated region
        $region21: #{speech_encoder_forward.1} parent=11 // pred_check
          %p253 = pneg %p120
        $region22: #{speech_encoder_forward.1} parent=11 // pred_check_branch
          %255 = sbr.rel (%p253) target = $region24
        $region23: #{speech_encoder_forward.1} parent=11 // pred_region
          _
        $region24: #{speech_encoder_forward.1} parent=11 // pred_fallthru
          _
        // Predicated region
        $region25: #{speech_encoder_forward.1} parent=11 // pred_check
          %p256 = pneg %p141
        $region26: #{speech_encoder_forward.1} parent=11 // pred_check_branch
          %258 = sbr.rel (%p256) target = $region28
        $region27: #{speech_encoder_forward.1} parent=11 // pred_region
          _
        $region28: #{speech_encoder_forward.1} parent=11 // pred_fallthru
          _
        // Predicated region
        $region29: #{speech_encoder_forward.1} parent=11 // pred_check
          %p259 = pneg %p162
        $region30: #{speech_encoder_forward.1} parent=11 // pred_check_branch
          %261 = sbr.rel (%p259) target = $region32
        $region31: #{speech_encoder_forward.1} parent=11 // pred_region
          _
        $region32: #{speech_encoder_forward.1} parent=11 // pred_fallthru
          _
        // Predicated region
        $region33: #{speech_encoder_forward.1} parent=11 // pred_check
          %p262 = pneg %p183
        $region34: #{speech_encoder_forward.1} parent=11 // pred_check_branch
          %264 = sbr.rel (%p262) target = $region36
        $region35: #{speech_encoder_forward.1} parent=11 // pred_region
          _
        $region36: #{speech_encoder_forward.1} parent=11 // pred_fallthru
          _
        // Predicated region
        $region37: #{speech_encoder_forward.1} parent=11 // pred_check
          %p265 = pneg %p204
        $region38: #{speech_encoder_forward.1} parent=11 // pred_check_branch
          %267 = sbr.rel (%p265) target = $region40
        $region39: #{speech_encoder_forward.1} parent=11 // pred_region
          _
        $region40: #{speech_encoder_forward.1} parent=11 // pred_fallthru
          _
      $region12: #{speech_encoder_forward.1} parent=5 // pred_fallthru
        _
      %p268 = scmp.lt.s32.totalorder %s17, 4
      // Predicated region
      $region41: #{speech_encoder_forward.1} parent=5 // pred_check
        %p269 = pneg %p268
      $region42: #{speech_encoder_forward.1} parent=5 // pred_check_branch
        %271 = sbr.rel (%p269) target = $region44
      $region43: #{speech_encoder_forward.1} parent=5 // pred_region
        // Predicated region
        $region45: #{speech_encoder_forward.1} parent=43 // pred_check
          %p272 = pneg %p51
        $region46: #{speech_encoder_forward.1} parent=43 // pred_check_branch
          %274 = sbr.rel (%p272) target = $region48
        $region47: #{speech_encoder_forward.1} parent=43 // pred_region
          %s275 = smul.u32 2, %s25
          %p276 = scmp.lt.s32.totalorder %s24, 1
          %s277 = scalar_select %p276, %s24, 1
          %p278 = scmp.lt.s32.totalorder %s275, 3
          %s279 = scalar_select %p278, %s275, 3
          %s280 = smul.addr %s277, 4
          %s281 = sadd.s32 %s279, %s280
          %s282 = smul.addr %s281, 4
          %s283 = scalar_lea.vmem %s0, %s282
          %s284 = smul.u32 2, %s25
        $region48: #{speech_encoder_forward.1} parent=43 // pred_fallthru
          _
      $region44: #{speech_encoder_forward.1} parent=5 // pred_fallthru
        _
      %p285 = scmp.le.s32.totalorder 1, %s17
      %p286 = scmp.lt.s32.totalorder %s17, 5
      %p287 = pnand %p285, %p286
      %p288 = pneg %p287
      // Predicated region
      $region49: #{speech_encoder_forward.1} parent=5 // pred_check
        _
      $region50: #{speech_encoder_forward.1} parent=5 // pred_check_branch
        %290 = sbr.rel (%p287) target = $region52
      $region51: #{speech_encoder_forward.1} parent=5 // pred_region
        %s291 = ssub.s32 %s17, 1
        %s292 = smul.u32 2, %s27
        %p293 = scmp.lt.s32.totalorder %s26, 1
        %s294 = scalar_select %p293, %s26, 1
        %p295 = scmp.lt.s32.totalorder %s292, 3
        %s296 = scalar_select %p295, %s292, 3
        %s297 = smul.addr %s294, 4
        %s298 = sadd.s32 %s296, %s297
        %s299 = smul.addr %s298, 4
        %s300 = scalar_lea.vmem %s0, %s299
        %p301 = pneg %p57
        %p302 = pneg %p54
        %p303 = pneg %p78
        %p304 = pneg %p75
        %p305 = pneg %p99
        %p306 = pneg %p96
        %p307 = pneg %p120
        %p308 = pneg %p117
        %p309 = pneg %p141
        %p310 = pneg %p138
        %p311 = pneg %p162
        %p312 = pneg %p159
        %p313 = pneg %p183
        %p314 = pneg %p180
        %p315 = pneg %p204
        %p316 = pneg %p201
        %p317 = pneg %p232
        %p318 = pneg %p229
        %s319 = sand.u32 %s219, 1
        %s320 = scalar_lea.sflag [#allocation3], %s319
        %s321 = sand.u32 %s219, 1
        %s322 = smul.addr %s321, 16
        %s323 = scalar_lea.vmem [#allocation2], %s322
        %s324 = smul.u32 2, %s27
        %p325 = scmp.lt.s32.totalorder %s26, 1
        %s326 = scalar_select %p325, %s26, 1
        %p327 = scmp.lt.s32.totalorder %s324, 3
        %s328 = scalar_select %p327, %s324, 3
        %s329 = smul.addr %s326, 4
        %s330 = sadd.s32 %s328, %s329
        %s331 = smul.addr %s330, 4
        %s332 = scalar_lea.vmem %s0, %s331
        %s333 = smul.u32 2, %s27
        %s334 = smul.u32 2, %s27
        %v336 = vld [vmem:[%s332] sm:$0xf]
        %v337 = vld [vmem:[%s332 + $0x4] sm:$0xf]
        %v338 = vld [vmem:[%s1] sm:$0xff]
        %v339 = vld [vmem:[%s1 + $0x8] sm:$0xff]
        %v340 = vld [vmem:[%s1 + $0x10] sm:$0xff]
        %v341 = vld [vmem:[%s1 + $0x18] sm:$0xff]
        %v344 = vunpack.c.l.b16 %v336
        %v345 = vunpack.c.l.b16 %v337
        %v346 = vpack.c.b16 %v345, %v344
        %v351 = vunpack.c.l.b16 %v338
        %v352 = vunpack.c.h.b16 %v338
        %v353 = vunpack.c.l.b16 %v339
        %v354 = vunpack.c.h.b16 %v339
        %v355 = vunpack.c.l.b16 %v340
        %v356 = vunpack.c.h.b16 %v340
        %v357 = vunpack.c.l.b16 %v341
        %v358 = vunpack.c.h.b16 %v341
        %v359 = vpack.c.b16 %v353, %v351
        %v360 = vpack.c.b16 %v354, %v352
        %v361 = vpack.c.b16 %v357, %v355
        %v362 = vpack.c.b16 %v358, %v356
        %vm367 = vcmask 261120
        %v369 = vsel %vm367, %v346, 0
        %371 = vmatprep.subr.bf16.mxu0 %v360
        %372 = vmatpush1.bf16.msra.mxu0 %v359
        %373 = vmatprep.subr.bf16.mxu0 %v362
        %374 = vmatpush1.bf16.msra.mxu0 %v361
        %375 = vmatprep.subr.bf16.mxu0 0
        %376 = vmatpush1.bf16.msra.mxu0 0
        %377 = vmatprep.subr.bf16.mxu0 0
        %378 = vmatpush1.bf16.msra.mxu0 0
        %379 = vmatprep.subr.bf16.mxu0 0
        %380 = vmatpush1.bf16.msra.mxu0 0
        %381 = vmatprep.subr.bf16.mxu0 0
        %382 = vmatpush1.bf16.msra.mxu0 0
        %383 = vmatprep.subr.bf16.mxu0 0
        %384 = vmatpush1.bf16.msra.mxu0 0
        %385 = vmatprep.subr.bf16.mxu0 0
        %386 = vmatpush1.bf16.msra.mxu0 0
        %387 = vmatprep.subr.bf16.mxu0 0
        %388 = vmatpush1.bf16.msra.mxu0 0
        %389 = vmatprep.subr.bf16.mxu0 0
        %390 = vmatpush1.bf16.msra.mxu0 0
        %391 = vmatprep.subr.bf16.mxu0 0
        %392 = vmatpush1.bf16.msra.mxu0 0
        %393 = vmatprep.subr.bf16.mxu0 0
        %394 = vmatpush1.bf16.msra.mxu0 0
        %395 = vmatprep.subr.bf16.mxu0 0
        %396 = vmatpush1.bf16.msra.mxu0 0
        %397 = vmatprep.subr.bf16.mxu0 0
        %398 = vmatpush1.bf16.msra.mxu0 0
        %399 = vmatprep.subr.bf16.mxu0 0
        %400 = vmatpush1.bf16.msra.mxu0 0
        %401 = vmatprep.subr.bf16.mxu0 0
        %402 = vmatpush1.bf16.msra.mxu0 0
        %403 = vmatprep.mubr.bf16.mxu0 0
        %404 = vmatmul.mubr.bf16.gmra.mrb[0].mxu0 %v369
        %v405 = vpop.f32.mrb[0].mxu0
        %v406 = vadd.f32 0.0, %v405
        %v407 = vpop.f32.mrb[0].mxu0
        %v408 = vadd.f32 0.0, %v407
        %v409 = vpop.f32.mrb[0].mxu0
        %v410 = vadd.f32 0.0, %v409
        %v411 = vpop.f32.mrb[0].mxu0
        %v412 = vadd.f32 0.0, %v411
        %413 = vdwg.mxu0
        %v414 = vmul.f32 %v406, %v406
        %v415 = vmul.f32 %v410, %v410
        %v416 = vmul.f32 %v408, %v408
        %v417 = vmul.f32 %v412, %v412
        %v418 = vadd.f32 %v414, %v416
        %v419 = vadd.f32 %v415, %v417
        %v420 = vrsqrt.pop %v418
        %v421 = vmul.f32 %v418, %v420
        %vm422 = vcmp.eq.f32.partialorder %v418, inf
        %v423 = vsel %vm422, %v418, %v421
        %vm424 = vcmp.eq.f32.partialorder %v418, 0.0
        %v425 = vand.u32 %v418, 2147483648
        %v426 = vsel %vm424, %v425, %v423
        %v427 = vrsqrt.pop %v419
        %v428 = vmul.f32 %v419, %v427
        %vm429 = vcmp.eq.f32.partialorder %v419, inf
        %v430 = vsel %vm429, %v419, %v428
        %vm431 = vcmp.eq.f32.partialorder %v419, 0.0
        %v432 = vand.u32 %v419, 2147483648
        %v433 = vsel %vm431, %v432, %v430
        %434 = vadd.xlane.f32.xlu0 %v426
        %v435 = vpop.xlane.xlu0 %434
        %436 = vadd.xlane.f32.xlu0 %v433
        %v437 = vpop.xlane.xlu0 %436
        %v438 = vmul.f32 %v435, 0.05882353
        %v439 = vmul.f32 %v437, 0.05882353
        %v440 = vmul.f32 %v426, %v426
        %v441 = vmul.f32 %v433, %v433
        %442 = vadd.xlane.f32.xlu0 %v440
        %v443 = vpop.xlane.xlu0 %442
        %444 = vadd.xlane.f32.xlu0 %v441
        %v445 = vpop.xlane.xlu0 %444
        %v446 = vmul.f32 %v443, 0.05882353
        %v447 = vmul.f32 %v445, 0.05882353
        %v448 = vmul.f32 %v438, %v438
        %v449 = vmul.f32 %v439, %v439
        %v450 = vsub.f32 %v446, %v448
        %v451 = vsub.f32 %v447, %v449
        %v452 = vsub.f32 %v426, %v438
        %v453 = vsub.f32 %v433, %v439
        %v454 = vadd.f32 %v450, 1e-05
        %v455 = vadd.f32 %v451, 1e-05
        %v456 = vrsqrt.pop %v454
        %v457 = vrsqrt.pop %v455
        %v458 = vmul.f32 %v452, %v456
        %v459 = vmul.f32 %v453, %v457
        %v460 = vld [vmem:[%s2] sm:$0x1]
        %v462 = vlaneseq
        %v463 = vshrl.u32 %v462, 7
        %v464 = vsub.s32 0, %v463
        %v465 = vrot.slane %v460, %v464
        %v467 = vmul.f32 %v458, %v465
        %v468 = vmul.f32 %v459, %v465
        %v469 = vld [vmem:[%s3] sm:$0x1]
        %v471 = vlaneseq
        %v472 = vshrl.u32 %v471, 7
        %v473 = vsub.s32 0, %v472
        %v474 = vrot.slane %v469, %v473
        %v476 = vadd.f32 %v467, %v474
        %v477 = vadd.f32 %v468, %v474
        %v478 = vpack.c.bf16 %v477, %v476
        %v479 = vld [vmem:[%s4] sm:$0xf]
        %v480 = vld [vmem:[%s4 + $0x4] sm:$0xf]
        %v481 = vld [vmem:[%s4 + $0x8] sm:$0xf]
        %v482 = vld [vmem:[%s4 + $0xc] sm:$0xf]
        %v483 = vld [vmem:[%s4 + $0x10] sm:$0xf]
        %v484 = vld [vmem:[%s4 + $0x14] sm:$0xf]
        %v485 = vld [vmem:[%s4 + $0x18] sm:$0xf]
        %v486 = vld [vmem:[%s4 + $0x1c] sm:$0xf]
        %v487 = vld [vmem:[%s4 + $0x20] sm:$0xf]
        %v488 = vld [vmem:[%s4 + $0x24] sm:$0xf]
        %v489 = vld [vmem:[%s4 + $0x28] sm:$0xf]
        %v490 = vld [vmem:[%s4 + $0x2c] sm:$0xf]
        %v491 = vld [vmem:[%s4 + $0x30] sm:$0xf]
        %v492 = vld [vmem:[%s4 + $0x34] sm:$0xf]
        %v493 = vld [vmem:[%s4 + $0x38] sm:$0xf]
        %v494 = vld [vmem:[%s4 + $0x3c] sm:$0xf]
        %v495 = vld [vmem:[%s5] sm:$0x1]
        %v497 = vlaneseq
        %v498 = vshrl.u32 %v497, 7
        %v499 = vsub.s32 0, %v498
        %v500 = vrot.slane %v495, %v499
        %v518 = vunpack.c.l.b16 %v479
        %v519 = vunpack.c.l.b16 %v480
        %v520 = vunpack.c.l.b16 %v481
        %v521 = vunpack.c.l.b16 %v482
        %v522 = vunpack.c.l.b16 %v483
        %v523 = vunpack.c.l.b16 %v484
        %v524 = vunpack.c.l.b16 %v485
        %v525 = vunpack.c.l.b16 %v486
        %v526 = vunpack.c.l.b16 %v487
        %v527 = vunpack.c.l.b16 %v488
        %v528 = vunpack.c.l.b16 %v489
        %v529 = vunpack.c.l.b16 %v490
        %v530 = vunpack.c.l.b16 %v491
        %v531 = vunpack.c.l.b16 %v492
        %v532 = vunpack.c.l.b16 %v493
        %v533 = vunpack.c.l.b16 %v494
        %v534 = vpack.c.b16 %v519, %v518
        %v535 = vpack.c.b16 %v521, %v520
        %v536 = vpack.c.b16 %v523, %v522
        %v537 = vpack.c.b16 %v525, %v524
        %v538 = vpack.c.b16 %v527, %v526
        %v539 = vpack.c.b16 %v529, %v528
        %v540 = vpack.c.b16 %v531, %v530
        %v541 = vpack.c.b16 %v533, %v532
        %550 = vmatprep.subr.bf16.mxu0 0
        %551 = vmatpush1.bf16.msra.mxu0 %v534
        %552 = vmatprep.subr.bf16.mxu0 0
        %553 = vmatpush1.bf16.msra.mxu0 %v535
        %554 = vmatprep.subr.bf16.mxu0 0
        %555 = vmatpush1.bf16.msra.mxu0 %v536
        %556 = vmatprep.subr.bf16.mxu0 0
        %557 = vmatpush1.bf16.msra.mxu0 %v537
        %558 = vmatprep.subr.bf16.mxu0 0
        %559 = vmatpush1.bf16.msra.mxu0 %v538
        %560 = vmatprep.subr.bf16.mxu0 0
        %561 = vmatpush1.bf16.msra.mxu0 %v539
        %562 = vmatprep.subr.bf16.mxu0 0
        %563 = vmatpush1.bf16.msra.mxu0 %v540
        %564 = vmatprep.subr.bf16.mxu0 0
        %565 = vmatpush1.bf16.msra.mxu0 %v541
        %566 = vmatprep.subr.bf16.mxu0 0
        %567 = vmatpush1.bf16.msra.mxu0 0
        %568 = vmatprep.subr.bf16.mxu0 0
        %569 = vmatpush1.bf16.msra.mxu0 0
        %570 = vmatprep.subr.bf16.mxu0 0
        %571 = vmatpush1.bf16.msra.mxu0 0
        %572 = vmatprep.subr.bf16.mxu0 0
        %573 = vmatpush1.bf16.msra.mxu0 0
        %574 = vmatprep.subr.bf16.mxu0 0
        %575 = vmatpush1.bf16.msra.mxu0 0
        %576 = vmatprep.subr.bf16.mxu0 0
        %577 = vmatpush1.bf16.msra.mxu0 0
        %578 = vmatprep.subr.bf16.mxu0 0
        %579 = vmatpush1.bf16.msra.mxu0 0
        %580 = vmatprep.subr.bf16.mxu0 0
        %581 = vmatpush1.bf16.msra.mxu0 0
        %582 = vmatprep.mubr.bf16.mxu0 0
        %583 = vmatmul.mubr.bf16.gmra.mrb[0].mxu0 %v478
        %v584 = vpop.f32.mrb[0].mxu0
        %v585 = vadd.f32 %v500, %v584
        %v586 = vpop.f32.mrb[0].mxu0
        %v587 = vpop.f32.mrb[0].mxu0
        %v588 = vadd.f32 %v500, %v587
        %v589 = vpop.f32.mrb[0].mxu0
        %590 = vdwg.mxu0
        %v591 = vmax.f32 %v585, 0.0
        %v592 = vmax.f32 %v588, 0.0
        %v593 = vpack.c.bf16 %v592, %v591
        %v594 = vld [vmem:[%s6] sm:$0xf]
        %v595 = vld [vmem:[%s6 + $0x4] sm:$0xf]
        %v596 = vld [vmem:[%s6 + $0x8] sm:$0xf]
        %v597 = vld [vmem:[%s6 + $0xc] sm:$0xf]
        %v598 = vld [vmem:[%s6 + $0x10] sm:$0xf]
        %v599 = vld [vmem:[%s6 + $0x14] sm:$0xf]
        %v600 = vld [vmem:[%s6 + $0x18] sm:$0xf]
        %v601 = vld [vmem:[%s6 + $0x1c] sm:$0xf]
        %v602 = vld [vmem:[%s7] sm:$0x1]
        %v604 = vlaneseq
        %v605 = vshrl.u32 %v604, 7
        %v606 = vsub.s32 0, %v605
        %v607 = vrot.slane %v602, %v606
        %v617 = vunpack.c.l.b16 %v594
        %v618 = vunpack.c.l.b16 %v595
        %v619 = vunpack.c.l.b16 %v596
        %v620 = vunpack.c.l.b16 %v597
        %v621 = vunpack.c.l.b16 %v598
        %v622 = vunpack.c.l.b16 %v599
        %v623 = vunpack.c.l.b16 %v600
        %v624 = vunpack.c.l.b16 %v601
        %v625 = vpack.c.b16 %v618, %v617
        %v626 = vpack.c.b16 %v620, %v619
        %v627 = vpack.c.b16 %v622, %v621
        %v628 = vpack.c.b16 %v624, %v623
        %vm633 = vcmask 523264
        %v635 = vsel %vm633, %v593, 0
        %637 = vmatprep.subr.bf16.mxu0 0
        %638 = vmatpush1.bf16.msra.mxu0 %v625
        %639 = vmatprep.subr.bf16.mxu0 0
        %640 = vmatpush1.bf16.msra.mxu0 %v626
        %641 = vmatprep.subr.bf16.mxu0 0
        %642 = vmatpush1.bf16.msra.mxu0 %v627
        %643 = vmatprep.subr.bf16.mxu0 0
        %644 = vmatpush1.bf16.msra.mxu0 %v628
        %645 = vmatprep.subr.bf16.mxu0 0
        %646 = vmatpush1.bf16.msra.mxu0 0
        %647 = vmatprep.subr.bf16.mxu0 0
        %648 = vmatpush1.bf16.msra.mxu0 0
        %649 = vmatprep.subr.bf16.mxu0 0
        %650 = vmatpush1.bf16.msra.mxu0 0
        %651 = vmatprep.subr.bf16.mxu0 0
        %652 = vmatpush1.bf16.msra.mxu0 0
        %653 = vmatprep.subr.bf16.mxu0 0
        %654 = vmatpush1.bf16.msra.mxu0 0
        %655 = vmatprep.subr.bf16.mxu0 0
        %656 = vmatpush1.bf16.msra.mxu0 0
        %657 = vmatprep.subr.bf16.mxu0 0
        %658 = vmatpush1.bf16.msra.mxu0 0
        %659 = vmatprep.subr.bf16.mxu0 0
        %660 = vmatpush1.bf16.msra.mxu0 0
        %661 = vmatprep.subr.bf16.mxu0 0
        %662 = vmatpush1.bf16.msra.mxu0 0
        %663 = vmatprep.subr.bf16.mxu0 0
        %664 = vmatpush1.bf16.msra.mxu0 0
        %665 = vmatprep.subr.bf16.mxu0 0
        %666 = vmatpush1.bf16.msra.mxu0 0
        %667 = vmatprep.subr.bf16.mxu0 0
        %668 = vmatpush1.bf16.msra.mxu0 0
        %669 = vmatprep.mubr.bf16.mxu0 0
        %670 = vmatmul.mubr.bf16.gmra.mrb[0].mxu0 %v635
        %v671 = vpop.f32.mrb[0].mxu0
        %v672 = vadd.f32 %v607, %v671
        %v673 = vpop.f32.mrb[0].mxu0
        %v674 = vpop.f32.mrb[0].mxu0
        %v675 = vadd.f32 %v607, %v674
        %v676 = vpop.f32.mrb[0].mxu0
        %677 = vdwg.mxu0
        %678 = vst.msk [vmem:[%s323] sm:$0xff] %vm367, %v672
        %679 = vst.msk [vmem:[%s323 + $0x8] sm:$0xff] %vm367, %v675
        %s680 = sand.u32 %s219, 1
        %s681 = scalar_lea.sflag [#allocation3], %s680
        %s682 = sand.u32 %s219, 1
        %s683 = smul.addr %s682, 16
        %s684 = scalar_lea.vmem [#allocation2], %s683
        // Predicated region
        $region53: #{speech_encoder_forward.1} parent=51 // pred_check
          %p685 = pneg %p229
        $region54: #{speech_encoder_forward.1} parent=51 // pred_check_branch
          %687 = sbr.rel (%p685) target = $region56
        $region55: #{speech_encoder_forward.1} parent=51 // pred_region
          %s688 = smul.u32 2, %s27
          %s690 = ssub.s32 256, 256
          %691 = vsyncadd %s681, %s690
          %s692 = smul.addr %s26, 4
          %s693 = sadd.s32 %s688, %s692
          %s694 = smul.addr %s693, 128
          %s695 = scalar_lea.hbm %s8, %s694
          %s696 = sshll.u32 %s684, 4
          %s697 = int_to_ptr.vmem [resolvable:$true] %s696
          %702 = dma.vmem_to_hbm [thread:$0]  %s697, 256, %s695, %s681, 128, 128, 8
        $region56: #{speech_encoder_forward.1} parent=51 // pred_fallthru
          _
      $region52: #{speech_encoder_forward.1} parent=5 // pred_fallthru
        _
      %p703 = scmp.le.s32.totalorder 2, %s17
      // Predicated region
      $region57: #{speech_encoder_forward.1} parent=5 // pred_check
        %p704 = pneg %p703
      $region58: #{speech_encoder_forward.1} parent=5 // pred_check_branch
        %706 = sbr.rel (%p704) target = $region60
      $region59: #{speech_encoder_forward.1} parent=5 // pred_region
        %s707 = ssub.s32 %s17, 2
        // Predicated region
        $region61: #{speech_encoder_forward.1} parent=59 // pred_check
          %p708 = pneg %p235
        $region62: #{speech_encoder_forward.1} parent=59 // pred_check_branch
          %710 = sbr.rel (%p708) target = $region64
        $region63: #{speech_encoder_forward.1} parent=59 // pred_region
          %s711 = sand.u32 %s220, 1
          %s712 = scalar_lea.sflag [#allocation3], %s711
          %s713 = sand.u32 %s220, 1
          %s714 = smul.addr %s713, 16
          %s715 = scalar_lea.vmem [#allocation2], %s714
          %716 = dma.done %s712, 256
        $region64: #{speech_encoder_forward.1} parent=59 // pred_fallthru
          _
      $region60: #{speech_encoder_forward.1} parent=5 // pred_fallthru
        _
    $region6: #{speech_encoder_forward.1} parent=1 // loop_footer
      %s21 = sadd.s32 1, %s17
    $region7: #{speech_encoder_forward.1} parent=1 // loop_footer_branch
      %16 = sbr.rel target = $region3
    $region8: #{speech_encoder_forward.1} parent=1 // loop_exit
      _
    %717 = vsyncpa [#allocation3], 1
    %s718 = scalar_lea.sflag [#allocation3], 1
    %719 = vsyncpa %s718, 1

</llo_original>
